<compile_context>
chip_gen: v7x
topology: tpu7x:2x2x1
jax: 0.10.0
libtpu: 0.0.40
codegen_flags: <defaults>
</compile_context>

<pallas_src>
import functools

import jax
import jax.numpy as jnp
import numpy as np
from jax.experimental import pallas as pl
from jax.experimental.pallas import tpu as pltpu


# ----------------------------------------------------------------------------
# Pallas kernel
# ----------------------------------------------------------------------------
def _encoder_cell_kernel(
    h_ref, ch_ref,
    Wh_ref, bh_ref,       # stacked h-gate (+ g_f) weights (4H, 7H), bias (1, 7H)
    gWgo_ref, gbgo_ref,   # stacked g_g / g_o gate params (2H, 2H), (1, 2H)
    h_out_ref, ch_out_ref, g_out_ref,
    *, rec_steps, use_roll,
):
    B, S, H = h_ref.shape
    N = B * S

    # Flat (N, H) working state; reshapes hoisted out of the rec loop.
    h = h_ref[...].astype(jnp.float32).reshape(N, H)
    c_h = ch_ref[...].astype(jnp.float32).reshape(N, H)

    Wh = Wh_ref[...]
    bh = bh_ref[...]
    gWgo = gWgo_ref[...]
    gbgo = gbgo_ref[...]

    def mm(a, w):
        # Cast operands to the (possibly bf16) weight dtype; accumulate in f32.
        return jnp.dot(a.astype(w.dtype), w, preferred_element_type=jnp.float32)

    # Batch-boundary masks in the flat layout, computed once.
    row_in_seq = jax.lax.broadcasted_iota(jnp.int32, (N, H), 0) % S
    is_first = row_in_seq == 0
    is_last = row_in_seq == (S - 1)

    def shift_before(x):  # row n <- x[n-1] within a batch, zeros at s == 0
        if use_roll:
            r = pltpu.roll(x, 1, 0)          # XLU sublane rotate (wrap masked below)
        else:
            r = jnp.concatenate([jnp.zeros((1, H), jnp.float32), x[:-1, :]], axis=0)
        return jnp.where(is_first, 0.0, r)

    def shift_after(x):   # row n <- x[n+1] within a batch, zeros at s == S-1
        if use_roll:
            r = pltpu.roll(x, N - 1, 0)      # == roll by -1, kept non-negative
        else:
            r = jnp.concatenate([x[1:, :], jnp.zeros((1, H), jnp.float32)], axis=0)
        return jnp.where(is_last, 0.0, r)

    def bmean(x):         # per-batch mean over S: (N, H) -> (B, H)
        return jnp.mean(x.reshape(B, S, H), axis=1)

    g = bmean(h)
    c_g = bmean(c_h)

    # Static unroll: rec_steps is small (2). Switch to lax.fori_loop carrying
    # (h, c_h, g, c_g) if rec_steps grows beyond ~4 (vreg live-range pressure).
    for step in range(rec_steps):
        # At step 0, mean(h) is exactly the pre-loop g: skip the redundant reduce.
        g_tilde = g if step == 0 else bmean(h)

        h_before = shift_before(h)
        h_after = shift_after(h)
        ch_before = shift_before(c_h)
        ch_after = shift_after(c_h)

        rg = jnp.broadcast_to(g[:, None, :], (B, S, H)).reshape(N, H)
        rc_g = jnp.broadcast_to(c_g[:, None, :], (B, S, H)).reshape(N, H)

        # Single stacked matmul: (N, 4H) @ (4H, 7H) -> (N, 7H) preactivation.
        # Contraction is exactly 4H = 128 (exact v5e MXU depth); all 7 sigmoid
        # gates (f, l, r, q, i, o, g_f) come out of one wide activation.
        x = jnp.concatenate([h, h_before, h_after, rg], axis=1)   # (N, 4H)
        gates = jax.nn.sigmoid(mm(x, Wh) + bh)                    # (N, 7H), f32

        f_n = gates[:, 0 * H:1 * H]
        l_n = gates[:, 1 * H:2 * H]
        r_n = gates[:, 2 * H:3 * H]
        q_n = gates[:, 3 * H:4 * H]
        i_n = gates[:, 4 * H:5 * H]
        o_n = gates[:, 5 * H:6 * H]
        g_f_n = gates[:, 6 * H:7 * H]

        # ---------------- update g (uses OLD h / c_h / g / c_g) ----------------
        # g_g / g_o fused: [g | g_tilde] @ [[gZg|gZo]; [gWg|gWo]] + [gbg|gbo]
        ggo_in = jnp.concatenate([g, g_tilde], axis=1)            # (B, 2H)
        ggo = jax.nn.sigmoid(mm(ggo_in, gWgo) + gbgo)             # (B, 2H)
        g_g_n = ggo[:, :H]
        g_o_n = ggo[:, H:]

        c_g_n = (jnp.sum(g_f_n.reshape(B, S, H) * c_h.reshape(B, S, H), axis=1)
                 + g_g_n * c_g)
        g_n = g_o_n * jnp.tanh(c_g_n)

        # ---------------- update h (uses OLD c_h and OLD c_g) ------------------
        c_h_n = l_n * ch_before + r_n * ch_after + (f_n + i_n) * c_h + q_n * rc_g
        h_n = o_n * jnp.tanh(c_h_n)

        h, c_h, g, c_g = h_n, c_h_n, g_n, c_g_n
        # F.dropout(p=keep_prob, training=False) is the identity in eval mode.

    h_out_ref[...] = h.reshape(B, S, H).astype(h_out_ref.dtype)
    ch_out_ref[...] = c_h.reshape(B, S, H).astype(ch_out_ref.dtype)
    g_out_ref[...] = g[:, None, :].astype(g_out_ref.dtype)


# ----------------------------------------------------------------------------
# Wrapper-side weight stacking
# ----------------------------------------------------------------------------
def _stack_params(params, mxu_dtype=jnp.bfloat16):
    U, Wlr, W, Z, b = params["U"], params["Wlr"], params["W"], params["Z"], params["b"]
    gW, gZ, gb = params["gW"], params["gZ"], params["gb"]
    H = U.shape[-1]

    # Replicate the original torch code exactly: the o gate multiplies
    # reshaped_h by Wi (index 4), not Wo.
    W_used = jnp.stack([W[0], W[1], W[2], W[3], W[4], W[4]], axis=0)

    # Per-gate (4H, H) block: rows = [U+W (rh) ; Wlr[:H] (h_before) ;
    #                                 Wlr[H:] (h_after) ; Z (rg)].
    blocks = jnp.concatenate([U + W_used, Wlr, Z], axis=1)             # (6, 4H, H)
    Wh6 = jnp.transpose(blocks, (1, 0, 2)).reshape(4 * H, 6 * H)        # (4H, 6H)

    # 7th gate column = g_f: rows 0:H multiply h (g_Wf), rows 3H:4H multiply rg
    # (g_Zf); the h_before / h_after rows are zero.  Exact fusion.
    zero = jnp.zeros((H, H), jnp.float32)
    col_gf = jnp.concatenate([gW[0], zero, zero, gZ[0]], axis=0)        # (4H, H)
    Wh = jnp.concatenate([Wh6, col_gf], axis=1)                         # (4H, 7H)
    bh = jnp.concatenate([b.reshape(1, 6 * H), gb[0].reshape(1, H)], axis=1)  # (1, 7H)

    gWgo = jnp.concatenate(
        [jnp.concatenate([gZ[1], gZ[2]], axis=1),    # rows 0:H  multiply g
         jnp.concatenate([gW[1], gW[2]], axis=1)],   # rows H:2H multiply g_tilde
        axis=0)                                                         # (2H, 2H)
    gbgo = jnp.concatenate([gb[1], gb[2]], axis=1)                      # (1, 2H)

    # Only weight matrices are cast; biases stay f32 (added post-matmul).
    cast = lambda w: w.astype(mxu_dtype)
    return cast(Wh), bh, cast(gWgo), gbgo


def _is_v7_class_device():
    try:
        kind = jax.devices()[0].device_kind.lower()
    except Exception:
        return False
    return ("v7" in kind) or ("tpu7" in kind)


# ----------------------------------------------------------------------------
# Wrapper
# ----------------------------------------------------------------------------
def hmr_encoder_cell(h, c_h, params, *, rec_steps, mxu_dtype=jnp.bfloat16,
                     grid_over_batch=None):
    """Returns (hidden_states, cell_states, global_states) like the torch module.

    mxu_dtype: dtype of MXU operands/weights.  Default bf16 (single-pass MXU on
    v5e/v6e/v7x; accumulation and element-wise math stay f32).  Use
    jnp.float32 for exact parity with the f32 reference.
    grid_over_batch: shard the (fully batch-independent) recurrence over a
    grid=(B,) "parallel" axis so v7x's two TensorCores split the batch.  Default
    (None) auto-enables only on v7-class devices; on 1-TC v5e/v6e the grid-step
    overhead would exceed the work at this size.
    """
    B, S, H = h.shape
    Wh, bh, gWgo, gbgo = _stack_params(params, mxu_dtype)
    if grid_over_batch is None:
        grid_over_batch = _is_v7_class_device() and B > 1

    out_shape = (
        jax.ShapeDtypeStruct((B, S, H), h.dtype),
        jax.ShapeDtypeStruct((B, S, H), h.dtype),
        jax.ShapeDtypeStruct((B, 1, H), h.dtype),
    )

    def build(use_roll):
        kernel = functools.partial(_encoder_cell_kernel,
                                   rec_steps=rec_steps, use_roll=use_roll)
        if grid_over_batch and B > 1:
            # Per-batch blocks; weights use constant index maps (stay resident).
            return pl.pallas_call(
                kernel,
                out_shape=out_shape,
                grid=(B,),
                in_specs=[
                    pl.BlockSpec((1, S, H), lambda b: (b, 0, 0)),
                    pl.BlockSpec((1, S, H), lambda b: (b, 0, 0)),
                    pl.BlockSpec((4 * H, 7 * H), lambda b: (0, 0)),
                    pl.BlockSpec((1, 7 * H), lambda b: (0, 0)),
                    pl.BlockSpec((2 * H, 2 * H), lambda b: (0, 0)),
                    pl.BlockSpec((1, 2 * H), lambda b: (0, 0)),
                ],
                out_specs=(
                    pl.BlockSpec((1, S, H), lambda b: (b, 0, 0)),
                    pl.BlockSpec((1, S, H), lambda b: (b, 0, 0)),
                    pl.BlockSpec((1, 1, H), lambda b: (b, 0, 0)),
                ),
                compiler_params=pltpu.CompilerParams(
                    dimension_semantics=("parallel",)),
            )
        # Whole-array VMEM residency, no grid: at (B,S,H)=(2,8,32) everything is
        # a few KiB and grid-step overhead (~0.35 us) would dominate.
        vmem = lambda: pl.BlockSpec(memory_space=pltpu.MemorySpace.VMEM)
        return pl.pallas_call(
            kernel,
            out_shape=out_shape,
            in_specs=[vmem() for _ in range(6)],
            out_specs=(vmem(), vmem(), vmem()),
        )

    args = (h, c_h, Wh, bh, gWgo, gbgo)
    try:
        return build(use_roll=True)(*args)
    except Exception:
        # Fallback: if pltpu.roll on the sublane axis fails to lower on this
        # jax/libtpu build, retry with concat-based shifts (exact same math).
        return build(use_roll=False)(*args)


# ----------------------------------------------------------------------------
# Pure-JAX reference (direct port of the torch forward, train=False, W=1)
# ----------------------------------------------------------------------------
def hmr_encoder_cell_ref(h, c_h, params, *, rec_steps, mxu_dtype=jnp.float32):
    """mxu_dtype=float32: faithful f32 port of the torch forward.
    Other dtypes: same math, but matmul operands are cast to mxu_dtype with f32
    accumulation, and (U + W) is pre-summed in f32 and rounded once — matching
    the kernel's operand rounding so only accumulation order differs."""
    B, S, H = h.shape
    N = B * S
    U, Wlr, W, Z, b = params["U"], params["Wlr"], params["W"], params["Z"], params["b"]
    gW, gZ, gb = params["gW"], params["gZ"], params["gb"]
    # o gate uses Wi (index 4) instead of Wo, exactly as in the torch code.
    W_used = [W[0], W[1], W[2], W[3], W[4], W[4]]

    def mmr(a, w):
        return jnp.dot(a.astype(mxu_dtype), w.astype(mxu_dtype),
                       preferred_element_type=jnp.float32)

    exact_f32 = (mxu_dtype == jnp.float32)
    UW = None if exact_f32 else [U[gi] + W_used[gi] for gi in range(6)]

    g = jnp.mean(h, axis=1)
    c_g = jnp.mean(c_h, axis=1)

    def before(x):
        return jnp.concatenate([jnp.zeros_like(x[:, :1, :]), x[:, :-1, :]], axis=1)

    def after(x):
        return jnp.concatenate([x[:, 1:, :], jnp.zeros_like(x[:, :1, :])], axis=1)

    for _ in range(rec_steps):
        g_tilde = jnp.mean(h, axis=1)
        rh = h.reshape(N, H)
        rg = jnp.broadcast_to(g[:, None, :], (B, S, H)).reshape(N, H)
        g_f_n = jax.nn.sigmoid(mmr(rg, gZ[0]) + mmr(rh, gW[0]) + gb[0])
        g_g_n = jax.nn.sigmoid(mmr(g, gZ[1]) + mmr(g_tilde, gW[1]) + gb[1])
        g_o_n = jax.nn.sigmoid(mmr(g, gZ[2]) + mmr(g_tilde, gW[2]) + gb[2])
        c_g_n = jnp.sum(g_f_n.reshape(B, S, H) * c_h, axis=1) + g_g_n * c_g
        g_n = g_o_n * jnp.tanh(c_g_n)

        hb = before(h).reshape(N, H)
        ha = after(h).reshape(N, H)
        chb = before(c_h).reshape(N, H)
        cha = after(c_h).reshape(N, H)
        rc_h = c_h.reshape(N, H)
        rc_g = jnp.broadcast_to(c_g[:, None, :], (B, S, H)).reshape(N, H)
        hba = jnp.concatenate([hb, ha], axis=1)

        gates = []
        for gi in range(6):
            if exact_f32:
                pre = mmr(rh, U[gi]) + mmr(rh, W_used[gi])
            else:
                pre = mmr(rh, UW[gi])
            pre = pre + mmr(hba, Wlr[gi]) + mmr(rg, Z[gi]) + b[gi]
            gates.append(jax.nn.sigmoid(pre))
        f_n, l_n, r_n, q_n, i_n, o_n = gates

        c_h_n = l_n * chb + r_n * cha + f_n * rc_h + q_n * rc_g + i_n * rc_h
        h_n = o_n * jnp.tanh(c_h_n)

        h = h_n.reshape(B, S, H)
        c_h = c_h_n.reshape(B, S, H)
        g = g_n
        c_g = c_g_n

    return h, c_h, g.reshape(B, 1, H)


# ----------------------------------------------------------------------------
# Deterministic parameter init (shapes from the module __init__; std-normal)
# ----------------------------------------------------------------------------
def make_params(key, hidden_size):
    H = hidden_size
    keys = jax.random.split(key, 8)
    # h-gates, order: f, l, r, q, i, o
    U = jax.random.normal(keys[0], (6, H, H), jnp.float32)        # Uf..Uo
    Wlr = jax.random.normal(keys[1], (6, 2 * H, H), jnp.float32)  # Wlrf..Wlro
    W = jax.random.normal(keys[2], (6, H, H), jnp.float32)        # Wf..Wo
    Z = jax.random.normal(keys[3], (6, H, H), jnp.float32)        # Zf..Zo
    b = jax.random.normal(keys[4], (6, 1, H), jnp.float32)        # bf..bo
    # g-gates, order: f, g, o
    gW = jax.random.normal(keys[5], (3, H, H), jnp.float32)
    gZ = jax.random.normal(keys[6], (3, H, H), jnp.float32)
    gb = jax.random.normal(keys[7], (3, 1, H), jnp.float32)
    return dict(U=U, Wlr=Wlr, W=W, Z=Z, b=b, gW=gW, gZ=gZ, gb=gb)


if __name__ == "__main__":
    # config: hidden_size=32, encoder_recurrent_steps=2, context_window=1, train=False
    B, S, H = 2, 8, 32
    REC_STEPS = 2

    key = jax.random.PRNGKey(0)
    k_h, k_c, k_p = jax.random.split(key, 3)
    h = jax.random.normal(k_h, (B, S, H), jnp.float32)
    c_h = jax.random.normal(k_c, (B, S, H), jnp.float32)
    params = make_params(k_p, H)

    # 1) f32 MXU path: exact parity with the faithful torch-port reference.
    hs32, cs32, gs32 = hmr_encoder_cell(h, c_h, params, rec_steps=REC_STEPS,
                                        mxu_dtype=jnp.float32)
    jax.block_until_ready((hs32, cs32, gs32))
    hr32, cr32, gr32 = hmr_encoder_cell_ref(h, c_h, params, rec_steps=REC_STEPS)
    np.testing.assert_allclose(np.asarray(hs32), np.asarray(hr32), rtol=1e-4, atol=1e-4)
    np.testing.assert_allclose(np.asarray(cs32), np.asarray(cr32), rtol=1e-4, atol=1e-4)
    np.testing.assert_allclose(np.asarray(gs32), np.asarray(gr32), rtol=1e-4, atol=1e-4)

    # 2) default bf16 MXU operands (f32 accumulation/activations): compare
    #    against the reference run with matched operand rounding.
    hs, cs, gs = hmr_encoder_cell(h, c_h, params, rec_steps=REC_STEPS)
    jax.block_until_ready((hs, cs, gs))
    hrb, crb, grb = hmr_encoder_cell_ref(h, c_h, params, rec_steps=REC_STEPS,
                                         mxu_dtype=jnp.bfloat16)
    np.testing.assert_allclose(np.asarray(hs), np.asarray(hrb), rtol=2e-3, atol=2e-3)
    np.testing.assert_allclose(np.asarray(cs), np.asarray(crb), rtol=2e-3, atol=2e-3)
    np.testing.assert_allclose(np.asarray(gs), np.asarray(grb), rtol=2e-3, atol=2e-3)

    # 3) per-batch grid path (dual-TensorCore on v7x; correct on any TPU).
    hsg, csg, gsg = hmr_encoder_cell(h, c_h, params, rec_steps=REC_STEPS,
                                     grid_over_batch=True)
    jax.block_until_ready((hsg, csg, gsg))
    np.testing.assert_allclose(np.asarray(hsg), np.asarray(hrb), rtol=2e-3, atol=2e-3)
    np.testing.assert_allclose(np.asarray(csg), np.asarray(crb), rtol=2e-3, atol=2e-3)
    np.testing.assert_allclose(np.asarray(gsg), np.asarray(grb), rtol=2e-3, atol=2e-3)

    assert hs.shape == (B, S, H) and cs.shape == (B, S, H) and gs.shape == (B, 1, H)
    print("KERNEL_OK")
</pallas_src>

<mosaic_0001>
module attributes {stable_mosaic.version = 11 : i64} {
  func.func @_encoder_cell_kernel(%arg0: memref<2x8x32xf32, #tpu.memory_space<vmem>>, %arg1: memref<2x8x32xf32, #tpu.memory_space<vmem>>, %arg2: memref<128x224xf32, #tpu.memory_space<vmem>>, %arg3: memref<1x224xf32, #tpu.memory_space<vmem>>, %arg4: memref<64x64xf32, #tpu.memory_space<vmem>>, %arg5: memref<1x64xf32, #tpu.memory_space<vmem>>, %arg6: memref<2x8x32xf32, #tpu.memory_space<vmem>>, %arg7: memref<2x8x32xf32, #tpu.memory_space<vmem>>, %arg8: memref<2x1x32xf32, #tpu.memory_space<vmem>>) attributes {dimension_semantics = [], scalar_prefetch = 0 : i64, scratch_operands = 0 : i64, tpu.core_type = #tpu.core_type<tc>} {
    %c0 = arith.constant 0 : index
    %c0_0 = arith.constant 0 : index
    %c0_1 = arith.constant 0 : index
    %0 = vector.load %arg0[%c0, %c0_0, %c0_1] : memref<2x8x32xf32, #tpu.memory_space<vmem>>, vector<2x8x32xf32>
    %1 = vector.shape_cast %0 : vector<2x8x32xf32> to vector<16x32xf32>
    %c0_2 = arith.constant 0 : index
    %c0_3 = arith.constant 0 : index
    %c0_4 = arith.constant 0 : index
    %2 = vector.load %arg1[%c0_2, %c0_3, %c0_4] : memref<2x8x32xf32, #tpu.memory_space<vmem>>, vector<2x8x32xf32>
    %3 = vector.shape_cast %2 : vector<2x8x32xf32> to vector<16x32xf32>
    %c0_5 = arith.constant 0 : index
    %c0_6 = arith.constant 0 : index
    %4 = vector.load %arg2[%c0_5, %c0_6] : memref<128x224xf32, #tpu.memory_space<vmem>>, vector<128x224xf32>
    %c0_7 = arith.constant 0 : index
    %c0_8 = arith.constant 0 : index
    %5 = vector.load %arg3[%c0_7, %c0_8] : memref<1x224xf32, #tpu.memory_space<vmem>>, vector<1x224xf32>
    %c0_9 = arith.constant 0 : index
    %c0_10 = arith.constant 0 : index
    %6 = vector.load %arg4[%c0_9, %c0_10] : memref<64x64xf32, #tpu.memory_space<vmem>>, vector<64x64xf32>
    %c0_11 = arith.constant 0 : index
    %c0_12 = arith.constant 0 : index
    %7 = vector.load %arg5[%c0_11, %c0_12] : memref<1x64xf32, #tpu.memory_space<vmem>>, vector<1x64xf32>
    %8 = tpu.iota {dimensions = array<i32: 0>} : vector<16x32xi32>
    %c8_i32 = arith.constant 8 : i32
    %c0_i32 = arith.constant 0 : i32
    %9 = arith.cmpi eq, %c8_i32, %c0_i32 : i32
    %c1_i32 = arith.constant 1 : i32
    %10 = arith.select %9, %c1_i32, %c8_i32 : i32
    %11 = vector.broadcast %10 : i32 to vector<16x32xi32>
    %12 = arith.remsi %8, %11 : vector<16x32xi32>
    %c0_i32_13 = arith.constant 0 : i32
    %13 = vector.broadcast %c0_i32_13 : i32 to vector<16x32xi32>
    %14 = arith.cmpi ne, %12, %13 : vector<16x32xi32>
    %c0_i32_14 = arith.constant 0 : i32
    %15 = vector.broadcast %c0_i32_14 : i32 to vector<16x32xi32>
    %16 = arith.cmpi slt, %12, %15 : vector<16x32xi32>
    %c0_i32_15 = arith.constant 0 : i32
    %17 = arith.cmpi slt, %10, %c0_i32_15 : i32
    %18 = vector.broadcast %17 : i1 to vector<16x32xi1>
    %19 = vector.broadcast %18 : vector<16x32xi1> to vector<16x32xi1>
    %20 = arith.xori %16, %19 : vector<16x32xi1>
    %21 = arith.andi %20, %14 : vector<16x32xi1>
    %22 = vector.broadcast %10 : i32 to vector<16x32xi32>
    %23 = arith.addi %12, %22 : vector<16x32xi32>
    %24 = arith.select %21, %23, %12 : vector<16x32xi1>, vector<16x32xi32>
    %c0_i32_16 = arith.constant 0 : i32
    %25 = vector.broadcast %c0_i32_16 : i32 to vector<16x32xi32>
    %26 = arith.cmpi eq, %24, %25 : vector<16x32xi32>
    %c7_i32 = arith.constant 7 : i32
    %27 = vector.broadcast %c7_i32 : i32 to vector<16x32xi32>
    %28 = arith.cmpi eq, %24, %27 : vector<16x32xi32>
    %29 = vector.shape_cast %1 : vector<16x32xf32> to vector<2x8x32xf32>
    %cst = arith.constant dense<0.000000e+00> : vector<2x32xf32>
    %30 = vector.multi_reduction <add>, %29, %cst [1] : vector<2x8x32xf32> to vector<2x32xf32>
    %cst_17 = arith.constant 8.000000e+00 : f32
    %31 = vector.broadcast %cst_17 : f32 to vector<2x32xf32>
    %32 = arith.divf %30, %31 : vector<2x32xf32>
    %33 = vector.shape_cast %3 : vector<16x32xf32> to vector<2x8x32xf32>
    %cst_18 = arith.constant dense<0.000000e+00> : vector<2x32xf32>
    %34 = vector.multi_reduction <add>, %33, %cst_18 [1] : vector<2x8x32xf32> to vector<2x32xf32>
    %cst_19 = arith.constant 8.000000e+00 : f32
    %35 = vector.broadcast %cst_19 : f32 to vector<2x32xf32>
    %36 = arith.divf %34, %35 : vector<2x32xf32>
    %c1_i32_20 = arith.constant 1 : i32
    %37 = tpu.dynamic_rotate %1 by %c1_i32_20 dim 0 : vector<16x32xf32>, i32 -> vector<16x32xf32>
    %cst_21 = arith.constant 0.000000e+00 : f32
    %38 = vector.broadcast %cst_21 : f32 to vector<16x32xf32>
    %39 = arith.select %26, %38, %37 : vector<16x32xi1>, vector<16x32xf32>
    %c15_i32 = arith.constant 15 : i32
    %40 = tpu.dynamic_rotate %1 by %c15_i32 dim 0 : vector<16x32xf32>, i32 -> vector<16x32xf32>
    %cst_22 = arith.constant 0.000000e+00 : f32
    %41 = vector.broadcast %cst_22 : f32 to vector<16x32xf32>
    %42 = arith.select %28, %41, %40 : vector<16x32xi1>, vector<16x32xf32>
    %c1_i32_23 = arith.constant 1 : i32
    %43 = tpu.dynamic_rotate %3 by %c1_i32_23 dim 0 : vector<16x32xf32>, i32 -> vector<16x32xf32>
    %cst_24 = arith.constant 0.000000e+00 : f32
    %44 = vector.broadcast %cst_24 : f32 to vector<16x32xf32>
    %45 = arith.select %26, %44, %43 : vector<16x32xi1>, vector<16x32xf32>
    %c15_i32_25 = arith.constant 15 : i32
    %46 = tpu.dynamic_rotate %3 by %c15_i32_25 dim 0 : vector<16x32xf32>, i32 -> vector<16x32xf32>
    %cst_26 = arith.constant 0.000000e+00 : f32
    %47 = vector.broadcast %cst_26 : f32 to vector<16x32xf32>
    %48 = arith.select %28, %47, %46 : vector<16x32xi1>, vector<16x32xf32>
    %49 = vector.shape_cast %32 : vector<2x32xf32> to vector<2x1x32xf32>
    %50 = vector.shape_cast %49 : vector<2x1x32xf32> to vector<2x1x32xf32>
    %51 = vector.broadcast %50 : vector<2x1x32xf32> to vector<2x8x32xf32>
    %52 = vector.shape_cast %51 : vector<2x8x32xf32> to vector<16x32xf32>
    %53 = vector.shape_cast %36 : vector<2x32xf32> to vector<2x1x32xf32>
    %54 = vector.shape_cast %53 : vector<2x1x32xf32> to vector<2x1x32xf32>
    %55 = vector.broadcast %54 : vector<2x1x32xf32> to vector<2x8x32xf32>
    %56 = vector.shape_cast %55 : vector<2x8x32xf32> to vector<16x32xf32>
    %57 = tpu.concatenate %1, %39, %42, %52 in 1 : vector<16x32xf32>, vector<16x32xf32>, vector<16x32xf32>, vector<16x32xf32> -> vector<16x128xf32>
    %cst_27 = arith.constant dense<0.000000e+00> : vector<16x224xf32>
    %58 = tpu.matmul %57, %4, %cst_27 {dimension_numbers = #tpu.dot_dimension_numbers<[1], [0], [0], [1], [0, 0, 1, 1], [], []>} : vector<16x128xf32>, vector<128x224xf32>, vector<16x224xf32> -> vector<16x224xf32>
    %59 = vector.broadcast %5 : vector<1x224xf32> to vector<16x224xf32>
    %60 = arith.addf %58, %59 : vector<16x224xf32>
    %61 = arith.negf %60 : vector<16x224xf32>
    %62 = math.exp %61 : vector<16x224xf32>
    %cst_28 = arith.constant 1.000000e+00 : f32
    %63 = vector.broadcast %cst_28 : f32 to vector<16x224xf32>
    %64 = arith.addf %63, %62 : vector<16x224xf32>
    %65 = arith.divf %63, %64 : vector<16x224xf32>
    %66 = vector.extract_strided_slice %65 {offsets = [0, 0], sizes = [16, 32], strides = [1, 1]} : vector<16x224xf32> to vector<16x32xf32>
    %67 = vector.extract_strided_slice %65 {offsets = [0, 32], sizes = [16, 32], strides = [1, 1]} : vector<16x224xf32> to vector<16x32xf32>
    %68 = vector.extract_strided_slice %65 {offsets = [0, 64], sizes = [16, 32], strides = [1, 1]} : vector<16x224xf32> to vector<16x32xf32>
    %69 = vector.extract_strided_slice %65 {offsets = [0, 96], sizes = [16, 32], strides = [1, 1]} : vector<16x224xf32> to vector<16x32xf32>
    %70 = vector.extract_strided_slice %65 {offsets = [0, 128], sizes = [16, 32], strides = [1, 1]} : vector<16x224xf32> to vector<16x32xf32>
    %71 = vector.extract_strided_slice %65 {offsets = [0, 160], sizes = [16, 32], strides = [1, 1]} : vector<16x224xf32> to vector<16x32xf32>
    %72 = vector.extract_strided_slice %65 {offsets = [0, 192], sizes = [16, 32], strides = [1, 1]} : vector<16x224xf32> to vector<16x32xf32>
    %73 = tpu.concatenate %32, %32 in 1 : vector<2x32xf32>, vector<2x32xf32> -> vector<2x64xf32>
    %cst_29 = arith.constant dense<0.000000e+00> : vector<2x64xf32>
    %74 = tpu.matmul %73, %6, %cst_29 {dimension_numbers = #tpu.dot_dimension_numbers<[1], [0], [0], [1], [0, 0, 1, 1], [], []>} : vector<2x64xf32>, vector<64x64xf32>, vector<2x64xf32> -> vector<2x64xf32>
    %75 = vector.broadcast %7 : vector<1x64xf32> to vector<2x64xf32>
    %76 = arith.addf %74, %75 : vector<2x64xf32>
    %77 = arith.negf %76 : vector<2x64xf32>
    %78 = math.exp %77 : vector<2x64xf32>
    %cst_30 = arith.constant 1.000000e+00 : f32
    %79 = vector.broadcast %cst_30 : f32 to vector<2x64xf32>
    %80 = arith.addf %79, %78 : vector<2x64xf32>
    %81 = arith.divf %79, %80 : vector<2x64xf32>
    %82 = vector.extract_strided_slice %81 {offsets = [0, 0], sizes = [2, 32], strides = [1, 1]} : vector<2x64xf32> to vector<2x32xf32>
    %83 = vector.extract_strided_slice %81 {offsets = [0, 32], sizes = [2, 32], strides = [1, 1]} : vector<2x64xf32> to vector<2x32xf32>
    %84 = vector.shape_cast %72 : vector<16x32xf32> to vector<2x8x32xf32>
    %85 = vector.shape_cast %3 : vector<16x32xf32> to vector<2x8x32xf32>
    %86 = arith.mulf %84, %85 : vector<2x8x32xf32>
    %cst_31 = arith.constant dense<0.000000e+00> : vector<2x32xf32>
    %87 = vector.multi_reduction <add>, %86, %cst_31 [1] : vector<2x8x32xf32> to vector<2x32xf32>
    %88 = arith.mulf %82, %36 : vector<2x32xf32>
    %89 = arith.addf %87, %88 : vector<2x32xf32>
    %90 = math.tanh %89 : vector<2x32xf32>
    %91 = arith.mulf %83, %90 : vector<2x32xf32>
    %92 = arith.mulf %67, %45 : vector<16x32xf32>
    %93 = arith.mulf %68, %48 : vector<16x32xf32>
    %94 = arith.addf %92, %93 : vector<16x32xf32>
    %95 = arith.addf %66, %70 : vector<16x32xf32>
    %96 = arith.mulf %95, %3 : vector<16x32xf32>
    %97 = arith.addf %94, %96 : vector<16x32xf32>
    %98 = arith.mulf %69, %56 : vector<16x32xf32>
    %99 = arith.addf %97, %98 : vector<16x32xf32>
    %100 = math.tanh %99 : vector<16x32xf32>
    %101 = arith.mulf %71, %100 : vector<16x32xf32>
    %102 = vector.shape_cast %101 : vector<16x32xf32> to vector<2x8x32xf32>
    %cst_32 = arith.constant dense<0.000000e+00> : vector<2x32xf32>
    %103 = vector.multi_reduction <add>, %102, %cst_32 [1] : vector<2x8x32xf32> to vector<2x32xf32>
    %cst_33 = arith.constant 8.000000e+00 : f32
    %104 = vector.broadcast %cst_33 : f32 to vector<2x32xf32>
    %105 = arith.divf %103, %104 : vector<2x32xf32>
    %c1_i32_34 = arith.constant 1 : i32
    %106 = tpu.dynamic_rotate %101 by %c1_i32_34 dim 0 : vector<16x32xf32>, i32 -> vector<16x32xf32>
    %cst_35 = arith.constant 0.000000e+00 : f32
    %107 = vector.broadcast %cst_35 : f32 to vector<16x32xf32>
    %108 = arith.select %26, %107, %106 : vector<16x32xi1>, vector<16x32xf32>
    %c15_i32_36 = arith.constant 15 : i32
    %109 = tpu.dynamic_rotate %101 by %c15_i32_36 dim 0 : vector<16x32xf32>, i32 -> vector<16x32xf32>
    %cst_37 = arith.constant 0.000000e+00 : f32
    %110 = vector.broadcast %cst_37 : f32 to vector<16x32xf32>
    %111 = arith.select %28, %110, %109 : vector<16x32xi1>, vector<16x32xf32>
    %c1_i32_38 = arith.constant 1 : i32
    %112 = tpu.dynamic_rotate %99 by %c1_i32_38 dim 0 : vector<16x32xf32>, i32 -> vector<16x32xf32>
    %cst_39 = arith.constant 0.000000e+00 : f32
    %113 = vector.broadcast %cst_39 : f32 to vector<16x32xf32>
    %114 = arith.select %26, %113, %112 : vector<16x32xi1>, vector<16x32xf32>
    %c15_i32_40 = arith.constant 15 : i32
    %115 = tpu.dynamic_rotate %99 by %c15_i32_40 dim 0 : vector<16x32xf32>, i32 -> vector<16x32xf32>
    %cst_41 = arith.constant 0.000000e+00 : f32
    %116 = vector.broadcast %cst_41 : f32 to vector<16x32xf32>
    %117 = arith.select %28, %116, %115 : vector<16x32xi1>, vector<16x32xf32>
    %118 = vector.shape_cast %91 : vector<2x32xf32> to vector<2x1x32xf32>
    %119 = vector.shape_cast %118 : vector<2x1x32xf32> to vector<2x1x32xf32>
    %120 = vector.broadcast %119 : vector<2x1x32xf32> to vector<2x8x32xf32>
    %121 = vector.shape_cast %120 : vector<2x8x32xf32> to vector<16x32xf32>
    %122 = vector.shape_cast %89 : vector<2x32xf32> to vector<2x1x32xf32>
    %123 = vector.shape_cast %122 : vector<2x1x32xf32> to vector<2x1x32xf32>
    %124 = vector.broadcast %123 : vector<2x1x32xf32> to vector<2x8x32xf32>
    %125 = vector.shape_cast %124 : vector<2x8x32xf32> to vector<16x32xf32>
    %126 = tpu.concatenate %101, %108, %111, %121 in 1 : vector<16x32xf32>, vector<16x32xf32>, vector<16x32xf32>, vector<16x32xf32> -> vector<16x128xf32>
    %cst_42 = arith.constant dense<0.000000e+00> : vector<16x224xf32>
    %127 = tpu.matmul %126, %4, %cst_42 {dimension_numbers = #tpu.dot_dimension_numbers<[1], [0], [0], [1], [0, 0, 1, 1], [], []>} : vector<16x128xf32>, vector<128x224xf32>, vector<16x224xf32> -> vector<16x224xf32>
    %128 = vector.broadcast %5 : vector<1x224xf32> to vector<16x224xf32>
    %129 = arith.addf %127, %128 : vector<16x224xf32>
    %130 = arith.negf %129 : vector<16x224xf32>
    %131 = math.exp %130 : vector<16x224xf32>
    %cst_43 = arith.constant 1.000000e+00 : f32
    %132 = vector.broadcast %cst_43 : f32 to vector<16x224xf32>
    %133 = arith.addf %132, %131 : vector<16x224xf32>
    %134 = arith.divf %132, %133 : vector<16x224xf32>
    %135 = vector.extract_strided_slice %134 {offsets = [0, 0], sizes = [16, 32], strides = [1, 1]} : vector<16x224xf32> to vector<16x32xf32>
    %136 = vector.extract_strided_slice %134 {offsets = [0, 32], sizes = [16, 32], strides = [1, 1]} : vector<16x224xf32> to vector<16x32xf32>
    %137 = vector.extract_strided_slice %134 {offsets = [0, 64], sizes = [16, 32], strides = [1, 1]} : vector<16x224xf32> to vector<16x32xf32>
    %138 = vector.extract_strided_slice %134 {offsets = [0, 96], sizes = [16, 32], strides = [1, 1]} : vector<16x224xf32> to vector<16x32xf32>
    %139 = vector.extract_strided_slice %134 {offsets = [0, 128], sizes = [16, 32], strides = [1, 1]} : vector<16x224xf32> to vector<16x32xf32>
    %140 = vector.extract_strided_slice %134 {offsets = [0, 160], sizes = [16, 32], strides = [1, 1]} : vector<16x224xf32> to vector<16x32xf32>
    %141 = vector.extract_strided_slice %134 {offsets = [0, 192], sizes = [16, 32], strides = [1, 1]} : vector<16x224xf32> to vector<16x32xf32>
    %142 = tpu.concatenate %91, %105 in 1 : vector<2x32xf32>, vector<2x32xf32> -> vector<2x64xf32>
    %cst_44 = arith.constant dense<0.000000e+00> : vector<2x64xf32>
    %143 = tpu.matmul %142, %6, %cst_44 {dimension_numbers = #tpu.dot_dimension_numbers<[1], [0], [0], [1], [0, 0, 1, 1], [], []>} : vector<2x64xf32>, vector<64x64xf32>, vector<2x64xf32> -> vector<2x64xf32>
    %144 = vector.broadcast %7 : vector<1x64xf32> to vector<2x64xf32>
    %145 = arith.addf %143, %144 : vector<2x64xf32>
    %146 = arith.negf %145 : vector<2x64xf32>
    %147 = math.exp %146 : vector<2x64xf32>
    %cst_45 = arith.constant 1.000000e+00 : f32
    %148 = vector.broadcast %cst_45 : f32 to vector<2x64xf32>
    %149 = arith.addf %148, %147 : vector<2x64xf32>
    %150 = arith.divf %148, %149 : vector<2x64xf32>
    %151 = vector.extract_strided_slice %150 {offsets = [0, 0], sizes = [2, 32], strides = [1, 1]} : vector<2x64xf32> to vector<2x32xf32>
    %152 = vector.extract_strided_slice %150 {offsets = [0, 32], sizes = [2, 32], strides = [1, 1]} : vector<2x64xf32> to vector<2x32xf32>
    %153 = vector.shape_cast %141 : vector<16x32xf32> to vector<2x8x32xf32>
    %154 = vector.shape_cast %99 : vector<16x32xf32> to vector<2x8x32xf32>
    %155 = arith.mulf %153, %154 : vector<2x8x32xf32>
    %cst_46 = arith.constant dense<0.000000e+00> : vector<2x32xf32>
    %156 = vector.multi_reduction <add>, %155, %cst_46 [1] : vector<2x8x32xf32> to vector<2x32xf32>
    %157 = arith.mulf %151, %89 : vector<2x32xf32>
    %158 = arith.addf %156, %157 : vector<2x32xf32>
    %159 = math.tanh %158 : vector<2x32xf32>
    %160 = arith.mulf %152, %159 : vector<2x32xf32>
    %161 = arith.mulf %136, %114 : vector<16x32xf32>
    %162 = arith.mulf %137, %117 : vector<16x32xf32>
    %163 = arith.addf %161, %162 : vector<16x32xf32>
    %164 = arith.addf %135, %139 : vector<16x32xf32>
    %165 = arith.mulf %164, %99 : vector<16x32xf32>
    %166 = arith.addf %163, %165 : vector<16x32xf32>
    %167 = arith.mulf %138, %125 : vector<16x32xf32>
    %168 = arith.addf %166, %167 : vector<16x32xf32>
    %169 = math.tanh %168 : vector<16x32xf32>
    %170 = arith.mulf %140, %169 : vector<16x32xf32>
    %171 = vector.shape_cast %170 : vector<16x32xf32> to vector<2x8x32xf32>
    %c0_47 = arith.constant 0 : index
    %c0_48 = arith.constant 0 : index
    %c0_49 = arith.constant 0 : index
    %172 = vector.load %arg6[%c0_47, %c0_48, %c0_49] : memref<2x8x32xf32, #tpu.memory_space<vmem>>, vector<2x8x32xf32>
    tpu.vector_store %arg6[%c0_47, %c0_48, %c0_49], %171 {strides = array<i32>} : memref<2x8x32xf32, #tpu.memory_space<vmem>>, vector<2x8x32xf32>,
    %173 = vector.shape_cast %168 : vector<16x32xf32> to vector<2x8x32xf32>
    %c0_50 = arith.constant 0 : index
    %c0_51 = arith.constant 0 : index
    %c0_52 = arith.constant 0 : index
    %174 = vector.load %arg7[%c0_50, %c0_51, %c0_52] : memref<2x8x32xf32, #tpu.memory_space<vmem>>, vector<2x8x32xf32>
    tpu.vector_store %arg7[%c0_50, %c0_51, %c0_52], %173 {strides = array<i32>} : memref<2x8x32xf32, #tpu.memory_space<vmem>>, vector<2x8x32xf32>,
    %175 = vector.shape_cast %160 : vector<2x32xf32> to vector<2x1x32xf32>
    %c0_53 = arith.constant 0 : index
    %c0_54 = arith.constant 0 : index
    %c0_55 = arith.constant 0 : index
    %176 = vector.load %arg8[%c0_53, %c0_54, %c0_55] : memref<2x1x32xf32, #tpu.memory_space<vmem>>, vector<2x1x32xf32>
    tpu.vector_store %arg8[%c0_53, %c0_54, %c0_55], %175 {strides = array<i32>} : memref<2x1x32xf32, #tpu.memory_space<vmem>>, vector<2x1x32xf32>,
    return
  }
}

module attributes {stable_mosaic.version = 11 : i64} {
  func.func @_encoder_cell_kernel(%arg0: memref<2x8x32xf32, #tpu.memory_space<vmem>>, %arg1: memref<2x8x32xf32, #tpu.memory_space<vmem>>, %arg2: memref<128x224xf32, #tpu.memory_space<vmem>>, %arg3: memref<1x224xf32, #tpu.memory_space<vmem>>, %arg4: memref<64x64xf32, #tpu.memory_space<vmem>>, %arg5: memref<1x64xf32, #tpu.memory_space<vmem>>, %arg6: memref<2x8x32xf32, #tpu.memory_space<vmem>>, %arg7: memref<2x8x32xf32, #tpu.memory_space<vmem>>, %arg8: memref<2x1x32xf32, #tpu.memory_space<vmem>>) attributes {dimension_semantics = [], scalar_prefetch = 0 : i64, scratch_operands = 0 : i64, tpu.core_type = #tpu.core_type<tc>} {
    %c0 = arith.constant 0 : index
    %c0_0 = arith.constant 0 : index
    %c0_1 = arith.constant 0 : index
    %0 = vector.load %arg0[%c0, %c0_0, %c0_1] : memref<2x8x32xf32, #tpu.memory_space<vmem>>, vector<2x8x32xf32>
    %1 = vector.shape_cast %0 : vector<2x8x32xf32> to vector<16x32xf32>
    %c0_2 = arith.constant 0 : index
    %c0_3 = arith.constant 0 : index
    %c0_4 = arith.constant 0 : index
    %2 = vector.load %arg1[%c0_2, %c0_3, %c0_4] : memref<2x8x32xf32, #tpu.memory_space<vmem>>, vector<2x8x32xf32>
    %3 = vector.shape_cast %2 : vector<2x8x32xf32> to vector<16x32xf32>
    %c0_5 = arith.constant 0 : index
    %c0_6 = arith.constant 0 : index
    %4 = vector.load %arg2[%c0_5, %c0_6] : memref<128x224xf32, #tpu.memory_space<vmem>>, vector<128x224xf32>
    %c0_7 = arith.constant 0 : index
    %c0_8 = arith.constant 0 : index
    %5 = vector.load %arg3[%c0_7, %c0_8] : memref<1x224xf32, #tpu.memory_space<vmem>>, vector<1x224xf32>
    %c0_9 = arith.constant 0 : index
    %c0_10 = arith.constant 0 : index
    %6 = vector.load %arg4[%c0_9, %c0_10] : memref<64x64xf32, #tpu.memory_space<vmem>>, vector<64x64xf32>
    %c0_11 = arith.constant 0 : index
    %c0_12 = arith.constant 0 : index
    %7 = vector.load %arg5[%c0_11, %c0_12] : memref<1x64xf32, #tpu.memory_space<vmem>>, vector<1x64xf32>
    %8 = tpu.iota {dimensions = array<i32: 0>} : vector<16x32xi32>
    %c8_i32 = arith.constant 8 : i32
    %c0_i32 = arith.constant 0 : i32
    %9 = arith.cmpi eq, %c8_i32, %c0_i32 : i32
    %c1_i32 = arith.constant 1 : i32
    %10 = arith.select %9, %c1_i32, %c8_i32 : i32
    %11 = vector.broadcast %10 : i32 to vector<16x32xi32>
    %12 = arith.remsi %8, %11 : vector<16x32xi32>
    %c0_i32_13 = arith.constant 0 : i32
    %13 = vector.broadcast %c0_i32_13 : i32 to vector<16x32xi32>
    %14 = arith.cmpi ne, %12, %13 : vector<16x32xi32>
    %c0_i32_14 = arith.constant 0 : i32
    %15 = vector.broadcast %c0_i32_14 : i32 to vector<16x32xi32>
    %16 = arith.cmpi slt, %12, %15 : vector<16x32xi32>
    %c0_i32_15 = arith.constant 0 : i32
    %17 = arith.cmpi slt, %10, %c0_i32_15 : i32
    %18 = vector.broadcast %17 : i1 to vector<16x32xi1>
    %19 = vector.broadcast %18 : vector<16x32xi1> to vector<16x32xi1>
    %20 = arith.xori %16, %19 : vector<16x32xi1>
    %21 = arith.andi %20, %14 : vector<16x32xi1>
    %22 = vector.broadcast %10 : i32 to vector<16x32xi32>
    %23 = arith.addi %12, %22 : vector<16x32xi32>
    %24 = arith.select %21, %23, %12 : vector<16x32xi1>, vector<16x32xi32>
    %c0_i32_16 = arith.constant 0 : i32
    %25 = vector.broadcast %c0_i32_16 : i32 to vector<16x32xi32>
    %26 = arith.cmpi eq, %24, %25 : vector<16x32xi32>
    %c7_i32 = arith.constant 7 : i32
    %27 = vector.broadcast %c7_i32 : i32 to vector<16x32xi32>
    %28 = arith.cmpi eq, %24, %27 : vector<16x32xi32>
    %29 = vector.shape_cast %1 : vector<16x32xf32> to vector<2x8x32xf32>
    %cst = arith.constant dense<0.000000e+00> : vector<2x32xf32>
    %30 = vector.multi_reduction <add>, %29, %cst [1] : vector<2x8x32xf32> to vector<2x32xf32>
    %cst_17 = arith.constant 8.000000e+00 : f32
    %31 = vector.broadcast %cst_17 : f32 to vector<2x32xf32>
    %32 = arith.divf %30, %31 : vector<2x32xf32>
    %33 = vector.shape_cast %3 : vector<16x32xf32> to vector<2x8x32xf32>
    %cst_18 = arith.constant dense<0.000000e+00> : vector<2x32xf32>
    %34 = vector.multi_reduction <add>, %33, %cst_18 [1] : vector<2x8x32xf32> to vector<2x32xf32>
    %cst_19 = arith.constant 8.000000e+00 : f32
    %35 = vector.broadcast %cst_19 : f32 to vector<2x32xf32>
    %36 = arith.divf %34, %35 : vector<2x32xf32>
    %cst_20 = arith.constant 0.000000e+00 : f32
    %37 = vector.broadcast %cst_20 : f32 to vector<1x32xf32>
    %38 = vector.extract_strided_slice %1 {offsets = [0, 0], sizes = [15, 32], strides = [1, 1]} : vector<16x32xf32> to vector<15x32xf32>
    %39 = tpu.concatenate %37, %38 in 0 : vector<1x32xf32>, vector<15x32xf32> -> vector<16x32xf32>
    %cst_21 = arith.constant 0.000000e+00 : f32
    %40 = vector.broadcast %cst_21 : f32 to vector<16x32xf32>
    %41 = arith.select %26, %40, %39 : vector<16x32xi1>, vector<16x32xf32>
    %42 = vector.extract_strided_slice %1 {offsets = [1, 0], sizes = [15, 32], strides = [1, 1]} : vector<16x32xf32> to vector<15x32xf32>
    %cst_22 = arith.constant 0.000000e+00 : f32
    %43 = vector.broadcast %cst_22 : f32 to vector<1x32xf32>
    %44 = tpu.concatenate %42, %43 in 0 : vector<15x32xf32>, vector<1x32xf32> -> vector<16x32xf32>
    %cst_23 = arith.constant 0.000000e+00 : f32
    %45 = vector.broadcast %cst_23 : f32 to vector<16x32xf32>
    %46 = arith.select %28, %45, %44 : vector<16x32xi1>, vector<16x32xf32>
    %cst_24 = arith.constant 0.000000e+00 : f32
    %47 = vector.broadcast %cst_24 : f32 to vector<1x32xf32>
    %48 = vector.extract_strided_slice %3 {offsets = [0, 0], sizes = [15, 32], strides = [1, 1]} : vector<16x32xf32> to vector<15x32xf32>
    %49 = tpu.concatenate %47, %48 in 0 : vector<1x32xf32>, vector<15x32xf32> -> vector<16x32xf32>
    %cst_25 = arith.constant 0.000000e+00 : f32
    %50 = vector.broadcast %cst_25 : f32 to vector<16x32xf32>
    %51 = arith.select %26, %50, %49 : vector<16x32xi1>, vector<16x32xf32>
    %52 = vector.extract_strided_slice %3 {offsets = [1, 0], sizes = [15, 32], strides = [1, 1]} : vector<16x32xf32> to vector<15x32xf32>
    %cst_26 = arith.constant 0.000000e+00 : f32
    %53 = vector.broadcast %cst_26 : f32 to vector<1x32xf32>
    %54 = tpu.concatenate %52, %53 in 0 : vector<15x32xf32>, vector<1x32xf32> -> vector<16x32xf32>
    %cst_27 = arith.constant 0.000000e+00 : f32
    %55 = vector.broadcast %cst_27 : f32 to vector<16x32xf32>
    %56 = arith.select %28, %55, %54 : vector<16x32xi1>, vector<16x32xf32>
    %57 = vector.shape_cast %32 : vector<2x32xf32> to vector<2x1x32xf32>
    %58 = vector.shape_cast %57 : vector<2x1x32xf32> to vector<2x1x32xf32>
    %59 = vector.broadcast %58 : vector<2x1x32xf32> to vector<2x8x32xf32>
    %60 = vector.shape_cast %59 : vector<2x8x32xf32> to vector<16x32xf32>
    %61 = vector.shape_cast %36 : vector<2x32xf32> to vector<2x1x32xf32>
    %62 = vector.shape_cast %61 : vector<2x1x32xf32> to vector<2x1x32xf32>
    %63 = vector.broadcast %62 : vector<2x1x32xf32> to vector<2x8x32xf32>
    %64 = vector.shape_cast %63 : vector<2x8x32xf32> to vector<16x32xf32>
    %65 = tpu.concatenate %1, %41, %46, %60 in 1 : vector<16x32xf32>, vector<16x32xf32>, vector<16x32xf32>, vector<16x32xf32> -> vector<16x128xf32>
    %cst_28 = arith.constant dense<0.000000e+00> : vector<16x224xf32>
    %66 = tpu.matmul %65, %4, %cst_28 {dimension_numbers = #tpu.dot_dimension_numbers<[1], [0], [0], [1], [0, 0, 1, 1], [], []>} : vector<16x128xf32>, vector<128x224xf32>, vector<16x224xf32> -> vector<16x224xf32>
    %67 = vector.broadcast %5 : vector<1x224xf32> to vector<16x224xf32>
    %68 = arith.addf %66, %67 : vector<16x224xf32>
    %69 = arith.negf %68 : vector<16x224xf32>
    %70 = math.exp %69 : vector<16x224xf32>
    %cst_29 = arith.constant 1.000000e+00 : f32
    %71 = vector.broadcast %cst_29 : f32 to vector<16x224xf32>
    %72 = arith.addf %71, %70 : vector<16x224xf32>
    %73 = arith.divf %71, %72 : vector<16x224xf32>
    %74 = vector.extract_strided_slice %73 {offsets = [0, 0], sizes = [16, 32], strides = [1, 1]} : vector<16x224xf32> to vector<16x32xf32>
    %75 = vector.extract_strided_slice %73 {offsets = [0, 32], sizes = [16, 32], strides = [1, 1]} : vector<16x224xf32> to vector<16x32xf32>
    %76 = vector.extract_strided_slice %73 {offsets = [0, 64], sizes = [16, 32], strides = [1, 1]} : vector<16x224xf32> to vector<16x32xf32>
    %77 = vector.extract_strided_slice %73 {offsets = [0, 96], sizes = [16, 32], strides = [1, 1]} : vector<16x224xf32> to vector<16x32xf32>
    %78 = vector.extract_strided_slice %73 {offsets = [0, 128], sizes = [16, 32], strides = [1, 1]} : vector<16x224xf32> to vector<16x32xf32>
    %79 = vector.extract_strided_slice %73 {offsets = [0, 160], sizes = [16, 32], strides = [1, 1]} : vector<16x224xf32> to vector<16x32xf32>
    %80 = vector.extract_strided_slice %73 {offsets = [0, 192], sizes = [16, 32], strides = [1, 1]} : vector<16x224xf32> to vector<16x32xf32>
    %81 = tpu.concatenate %32, %32 in 1 : vector<2x32xf32>, vector<2x32xf32> -> vector<2x64xf32>
    %cst_30 = arith.constant dense<0.000000e+00> : vector<2x64xf32>
    %82 = tpu.matmul %81, %6, %cst_30 {dimension_numbers = #tpu.dot_dimension_numbers<[1], [0], [0], [1], [0, 0, 1, 1], [], []>} : vector<2x64xf32>, vector<64x64xf32>, vector<2x64xf32> -> vector<2x64xf32>
    %83 = vector.broadcast %7 : vector<1x64xf32> to vector<2x64xf32>
    %84 = arith.addf %82, %83 : vector<2x64xf32>
    %85 = arith.negf %84 : vector<2x64xf32>
    %86 = math.exp %85 : vector<2x64xf32>
    %cst_31 = arith.constant 1.000000e+00 : f32
    %87 = vector.broadcast %cst_31 : f32 to vector<2x64xf32>
    %88 = arith.addf %87, %86 : vector<2x64xf32>
    %89 = arith.divf %87, %88 : vector<2x64xf32>
    %90 = vector.extract_strided_slice %89 {offsets = [0, 0], sizes = [2, 32], strides = [1, 1]} : vector<2x64xf32> to vector<2x32xf32>
    %91 = vector.extract_strided_slice %89 {offsets = [0, 32], sizes = [2, 32], strides = [1, 1]} : vector<2x64xf32> to vector<2x32xf32>
    %92 = vector.shape_cast %80 : vector<16x32xf32> to vector<2x8x32xf32>
    %93 = vector.shape_cast %3 : vector<16x32xf32> to vector<2x8x32xf32>
    %94 = arith.mulf %92, %93 : vector<2x8x32xf32>
    %cst_32 = arith.constant dense<0.000000e+00> : vector<2x32xf32>
    %95 = vector.multi_reduction <add>, %94, %cst_32 [1] : vector<2x8x32xf32> to vector<2x32xf32>
    %96 = arith.mulf %90, %36 : vector<2x32xf32>
    %97 = arith.addf %95, %96 : vector<2x32xf32>
    %98 = math.tanh %97 : vector<2x32xf32>
    %99 = arith.mulf %91, %98 : vector<2x32xf32>
    %100 = arith.mulf %75, %51 : vector<16x32xf32>
    %101 = arith.mulf %76, %56 : vector<16x32xf32>
    %102 = arith.addf %100, %101 : vector<16x32xf32>
    %103 = arith.addf %74, %78 : vector<16x32xf32>
    %104 = arith.mulf %103, %3 : vector<16x32xf32>
    %105 = arith.addf %102, %104 : vector<16x32xf32>
    %106 = arith.mulf %77, %64 : vector<16x32xf32>
    %107 = arith.addf %105, %106 : vector<16x32xf32>
    %108 = math.tanh %107 : vector<16x32xf32>
    %109 = arith.mulf %79, %108 : vector<16x32xf32>
    %110 = vector.shape_cast %109 : vector<16x32xf32> to vector<2x8x32xf32>
    %cst_33 = arith.constant dense<0.000000e+00> : vector<2x32xf32>
    %111 = vector.multi_reduction <add>, %110, %cst_33 [1] : vector<2x8x32xf32> to vector<2x32xf32>
    %cst_34 = arith.constant 8.000000e+00 : f32
    %112 = vector.broadcast %cst_34 : f32 to vector<2x32xf32>
    %113 = arith.divf %111, %112 : vector<2x32xf32>
    %cst_35 = arith.constant 0.000000e+00 : f32
    %114 = vector.broadcast %cst_35 : f32 to vector<1x32xf32>
    %115 = vector.extract_strided_slice %109 {offsets = [0, 0], sizes = [15, 32], strides = [1, 1]} : vector<16x32xf32> to vector<15x32xf32>
    %116 = tpu.concatenate %114, %115 in 0 : vector<1x32xf32>, vector<15x32xf32> -> vector<16x32xf32>
    %cst_36 = arith.constant 0.000000e+00 : f32
    %117 = vector.broadcast %cst_36 : f32 to vector<16x32xf32>
    %118 = arith.select %26, %117, %116 : vector<16x32xi1>, vector<16x32xf32>
    %119 = vector.extract_strided_slice %109 {offsets = [1, 0], sizes = [15, 32], strides = [1, 1]} : vector<16x32xf32> to vector<15x32xf32>
    %cst_37 = arith.constant 0.000000e+00 : f32
    %120 = vector.broadcast %cst_37 : f32 to vector<1x32xf32>
    %121 = tpu.concatenate %119, %120 in 0 : vector<15x32xf32>, vector<1x32xf32> -> vector<16x32xf32>
    %cst_38 = arith.constant 0.000000e+00 : f32
    %122 = vector.broadcast %cst_38 : f32 to vector<16x32xf32>
    %123 = arith.select %28, %122, %121 : vector<16x32xi1>, vector<16x32xf32>
    %cst_39 = arith.constant 0.000000e+00 : f32
    %124 = vector.broadcast %cst_39 : f32 to vector<1x32xf32>
    %125 = vector.extract_strided_slice %107 {offsets = [0, 0], sizes = [15, 32], strides = [1, 1]} : vector<16x32xf32> to vector<15x32xf32>
    %126 = tpu.concatenate %124, %125 in 0 : vector<1x32xf32>, vector<15x32xf32> -> vector<16x32xf32>
    %cst_40 = arith.constant 0.000000e+00 : f32
    %127 = vector.broadcast %cst_40 : f32 to vector<16x32xf32>
    %128 = arith.select %26, %127, %126 : vector<16x32xi1>, vector<16x32xf32>
    %129 = vector.extract_strided_slice %107 {offsets = [1, 0], sizes = [15, 32], strides = [1, 1]} : vector<16x32xf32> to vector<15x32xf32>
    %cst_41 = arith.constant 0.000000e+00 : f32
    %130 = vector.broadcast %cst_41 : f32 to vector<1x32xf32>
    %131 = tpu.concatenate %129, %130 in 0 : vector<15x32xf32>, vector<1x32xf32> -> vector<16x32xf32>
    %cst_42 = arith.constant 0.000000e+00 : f32
    %132 = vector.broadcast %cst_42 : f32 to vector<16x32xf32>
    %133 = arith.select %28, %132, %131 : vector<16x32xi1>, vector<16x32xf32>
    %134 = vector.shape_cast %99 : vector<2x32xf32> to vector<2x1x32xf32>
    %135 = vector.shape_cast %134 : vector<2x1x32xf32> to vector<2x1x32xf32>
    %136 = vector.broadcast %135 : vector<2x1x32xf32> to vector<2x8x32xf32>
    %137 = vector.shape_cast %136 : vector<2x8x32xf32> to vector<16x32xf32>
    %138 = vector.shape_cast %97 : vector<2x32xf32> to vector<2x1x32xf32>
    %139 = vector.shape_cast %138 : vector<2x1x32xf32> to vector<2x1x32xf32>
    %140 = vector.broadcast %139 : vector<2x1x32xf32> to vector<2x8x32xf32>
    %141 = vector.shape_cast %140 : vector<2x8x32xf32> to vector<16x32xf32>
    %142 = tpu.concatenate %109, %118, %123, %137 in 1 : vector<16x32xf32>, vector<16x32xf32>, vector<16x32xf32>, vector<16x32xf32> -> vector<16x128xf32>
    %cst_43 = arith.constant dense<0.000000e+00> : vector<16x224xf32>
    %143 = tpu.matmul %142, %4, %cst_43 {dimension_numbers = #tpu.dot_dimension_numbers<[1], [0], [0], [1], [0, 0, 1, 1], [], []>} : vector<16x128xf32>, vector<128x224xf32>, vector<16x224xf32> -> vector<16x224xf32>
    %144 = vector.broadcast %5 : vector<1x224xf32> to vector<16x224xf32>
    %145 = arith.addf %143, %144 : vector<16x224xf32>
    %146 = arith.negf %145 : vector<16x224xf32>
    %147 = math.exp %146 : vector<16x224xf32>
    %cst_44 = arith.constant 1.000000e+00 : f32
    %148 = vector.broadcast %cst_44 : f32 to vector<16x224xf32>
    %149 = arith.addf %148, %147 : vector<16x224xf32>
    %150 = arith.divf %148, %149 : vector<16x224xf32>
    %151 = vector.extract_strided_slice %150 {offsets = [0, 0], sizes = [16, 32], strides = [1, 1]} : vector<16x224xf32> to vector<16x32xf32>
    %152 = vector.extract_strided_slice %150 {offsets = [0, 32], sizes = [16, 32], strides = [1, 1]} : vector<16x224xf32> to vector<16x32xf32>
    %153 = vector.extract_strided_slice %150 {offsets = [0, 64], sizes = [16, 32], strides = [1, 1]} : vector<16x224xf32> to vector<16x32xf32>
    %154 = vector.extract_strided_slice %150 {offsets = [0, 96], sizes = [16, 32], strides = [1, 1]} : vector<16x224xf32> to vector<16x32xf32>
    %155 = vector.extract_strided_slice %150 {offsets = [0, 128], sizes = [16, 32], strides = [1, 1]} : vector<16x224xf32> to vector<16x32xf32>
    %156 = vector.extract_strided_slice %150 {offsets = [0, 160], sizes = [16, 32], strides = [1, 1]} : vector<16x224xf32> to vector<16x32xf32>
    %157 = vector.extract_strided_slice %150 {offsets = [0, 192], sizes = [16, 32], strides = [1, 1]} : vector<16x224xf32> to vector<16x32xf32>
    %158 = tpu.concatenate %99, %113 in 1 : vector<2x32xf32>, vector<2x32xf32> -> vector<2x64xf32>
    %cst_45 = arith.constant dense<0.000000e+00> : vector<2x64xf32>
    %159 = tpu.matmul %158, %6, %cst_45 {dimension_numbers = #tpu.dot_dimension_numbers<[1], [0], [0], [1], [0, 0, 1, 1], [], []>} : vector<2x64xf32>, vector<64x64xf32>, vector<2x64xf32> -> vector<2x64xf32>
    %160 = vector.broadcast %7 : vector<1x64xf32> to vector<2x64xf32>
    %161 = arith.addf %159, %160 : vector<2x64xf32>
    %162 = arith.negf %161 : vector<2x64xf32>
    %163 = math.exp %162 : vector<2x64xf32>
    %cst_46 = arith.constant 1.000000e+00 : f32
    %164 = vector.broadcast %cst_46 : f32 to vector<2x64xf32>
    %165 = arith.addf %164, %163 : vector<2x64xf32>
    %166 = arith.divf %164, %165 : vector<2x64xf32>
    %167 = vector.extract_strided_slice %166 {offsets = [0, 0], sizes = [2, 32], strides = [1, 1]} : vector<2x64xf32> to vector<2x32xf32>
    %168 = vector.extract_strided_slice %166 {offsets = [0, 32], sizes = [2, 32], strides = [1, 1]} : vector<2x64xf32> to vector<2x32xf32>
    %169 = vector.shape_cast %157 : vector<16x32xf32> to vector<2x8x32xf32>
    %170 = vector.shape_cast %107 : vector<16x32xf32> to vector<2x8x32xf32>
    %171 = arith.mulf %169, %170 : vector<2x8x32xf32>
    %cst_47 = arith.constant dense<0.000000e+00> : vector<2x32xf32>
    %172 = vector.multi_reduction <add>, %171, %cst_47 [1] : vector<2x8x32xf32> to vector<2x32xf32>
    %173 = arith.mulf %167, %97 : vector<2x32xf32>
    %174 = arith.addf %172, %173 : vector<2x32xf32>
    %175 = math.tanh %174 : vector<2x32xf32>
    %176 = arith.mulf %168, %175 : vector<2x32xf32>
    %177 = arith.mulf %152, %128 : vector<16x32xf32>
    %178 = arith.mulf %153, %133 : vector<16x32xf32>
    %179 = arith.addf %177, %178 : vector<16x32xf32>
    %180 = arith.addf %151, %155 : vector<16x32xf32>
    %181 = arith.mulf %180, %107 : vector<16x32xf32>
    %182 = arith.addf %179, %181 : vector<16x32xf32>
    %183 = arith.mulf %154, %141 : vector<16x32xf32>
    %184 = arith.addf %182, %183 : vector<16x32xf32>
    %185 = math.tanh %184 : vector<16x32xf32>
    %186 = arith.mulf %156, %185 : vector<16x32xf32>
    %187 = vector.shape_cast %186 : vector<16x32xf32> to vector<2x8x32xf32>
    %c0_48 = arith.constant 0 : index
    %c0_49 = arith.constant 0 : index
    %c0_50 = arith.constant 0 : index
    %188 = vector.load %arg6[%c0_48, %c0_49, %c0_50] : memref<2x8x32xf32, #tpu.memory_space<vmem>>, vector<2x8x32xf32>
    tpu.vector_store %arg6[%c0_48, %c0_49, %c0_50], %187 {strides = array<i32>} : memref<2x8x32xf32, #tpu.memory_space<vmem>>, vector<2x8x32xf32>,
    %189 = vector.shape_cast %184 : vector<16x32xf32> to vector<2x8x32xf32>
    %c0_51 = arith.constant 0 : index
    %c0_52 = arith.constant 0 : index
    %c0_53 = arith.constant 0 : index
    %190 = vector.load %arg7[%c0_51, %c0_52, %c0_53] : memref<2x8x32xf32, #tpu.memory_space<vmem>>, vector<2x8x32xf32>
    tpu.vector_store %arg7[%c0_51, %c0_52, %c0_53], %189 {strides = array<i32>} : memref<2x8x32xf32, #tpu.memory_space<vmem>>, vector<2x8x32xf32>,
    %191 = vector.shape_cast %176 : vector<2x32xf32> to vector<2x1x32xf32>
    %c0_54 = arith.constant 0 : index
    %c0_55 = arith.constant 0 : index
    %c0_56 = arith.constant 0 : index
    %192 = vector.load %arg8[%c0_54, %c0_55, %c0_56] : memref<2x1x32xf32, #tpu.memory_space<vmem>>, vector<2x1x32xf32>
    tpu.vector_store %arg8[%c0_54, %c0_55, %c0_56], %191 {strides = array<i32>} : memref<2x1x32xf32, #tpu.memory_space<vmem>>, vector<2x1x32xf32>,
    return
  }
}

</mosaic_0001>

<llo_original>
// kernel: tpu_custom_call.1
$region0: #{tpu_custom_call.1}
  #allocation0 [shape = 'u32[]', space=smem, size = 0x4, offset = 0x4, fixed_abs, tag = 'smem constant byte address 0x4 - core index']
  #allocation1 [shape = 'u32[144,128]{1,0:T(1,128)}', space=vmem, size = 0x12000, scoped, tag = 'internal scratch']
  %s0 = inlined_call_operand.vmem [shape: f32[2,8,32], index: 0, kind: input, shape index: {}]
  %s1 = inlined_call_operand.vmem [shape: f32[2,8,32], index: 1, kind: input, shape index: {}]
  %s2 = inlined_call_operand.vmem [shape: f32[128,224], index: 2, kind: input, shape index: {}]
  %s3 = inlined_call_operand.vmem [shape: f32[1,224], index: 3, kind: input, shape index: {}]
  %s4 = inlined_call_operand.vmem [shape: f32[64,64], index: 4, kind: input, shape index: {}]
  %s5 = inlined_call_operand.vmem [shape: f32[1,64], index: 5, kind: input, shape index: {}]
  %s6 = inlined_call_operand.hbm [shape: f32[2,8,32], index: 6, kind: output, shape index: {0}]
  %s7 = inlined_call_operand.hbm [shape: f32[2,8,32], index: 7, kind: output, shape index: {1}]
  %s8 = inlined_call_operand.hbm [shape: f32[2,1,32], index: 8, kind: output, shape index: {2}]
  %9 = xla_tuple %s6, %s7, %s8
  %s10 = sld [smem:[#allocation0]]
  $region50: #{tpu_custom_call.1} parent=0
    _
  %s12 = ssub.s32 1, %s10
  %s13 = scalar_select 0, %s12, %s10
  $region1: #{tpu_custom_call.1} parent=0
    #allocation2 [shape = 'u8[8192]{0}', space=vmem, size = 0x2000, scoped, tag = 'output window, operand 0, single buffered']
    #allocation3 [shape = 's32[1]{0}', space=sflag, size = 0x4, scoped, tag = 'scoped memory for tpu_custom_call.1']
    #allocation4 [shape = 'u8[8192]{0}', space=vmem, size = 0x2000, scoped, tag = 'output window, operand 1, single buffered']
    #allocation5 [shape = 's32[1]{0}', space=sflag, size = 0x4, scoped, tag = 'scoped memory for tpu_custom_call.1']
    #allocation6 [shape = 'u8[1024]{0}', space=vmem, size = 0x400, scoped, tag = 'output window, operand 2, single buffered']
    %14 = vsyncpa [#allocation3], 0
    %15 = vsyncpa [#allocation5], 0
    // Predicated region
    $region2: #{tpu_custom_call.1} parent=1 // pred_check
      _
    $region3: #{tpu_custom_call.1} parent=1 // pred_check_branch
      %17 = sbr.rel (0) target = $region5
    $region4: #{tpu_custom_call.1} parent=1 // pred_region
      _
    $region5: #{tpu_custom_call.1} parent=1 // pred_fallthru
      _
    // Predicated region
    $region6: #{tpu_custom_call.1} parent=1 // pred_check
      _
    $region7: #{tpu_custom_call.1} parent=1 // pred_check_branch
      %19 = sbr.rel (0) target = $region9
    $region8: #{tpu_custom_call.1} parent=1 // pred_region
      _
    $region9: #{tpu_custom_call.1} parent=1 // pred_fallthru
      _
    // Predicated region
    $region10: #{tpu_custom_call.1} parent=1 // pred_check
      _
    $region11: #{tpu_custom_call.1} parent=1 // pred_check_branch
      %21 = sbr.rel (0) target = $region13
    $region12: #{tpu_custom_call.1} parent=1 // pred_region
      _
    $region13: #{tpu_custom_call.1} parent=1 // pred_fallthru
      _
    // Predicated region
    $region14: #{tpu_custom_call.1} parent=1 // pred_check
      _
    $region15: #{tpu_custom_call.1} parent=1 // pred_check_branch
      %23 = sbr.rel (0) target = $region17
    $region16: #{tpu_custom_call.1} parent=1 // pred_region
      _
    $region17: #{tpu_custom_call.1} parent=1 // pred_fallthru
      _
    // Predicated region
    $region18: #{tpu_custom_call.1} parent=1 // pred_check
      _
    $region19: #{tpu_custom_call.1} parent=1 // pred_check_branch
      %25 = sbr.rel (0) target = $region21
    $region20: #{tpu_custom_call.1} parent=1 // pred_region
      _
    $region21: #{tpu_custom_call.1} parent=1 // pred_fallthru
      _
    // Predicated region
    $region22: #{tpu_custom_call.1} parent=1 // pred_check
      _
    $region23: #{tpu_custom_call.1} parent=1 // pred_check_branch
      %27 = sbr.rel (0) target = $region25
    $region24: #{tpu_custom_call.1} parent=1 // pred_region
      _
    $region25: #{tpu_custom_call.1} parent=1 // pred_fallthru
      _
    %v28 = vld [vmem:[%s0] sm:$0xff]
    %v29 = vld [vmem:[%s0 + $0x8] sm:$0xff]
    %v30 = vld [vmem:[%s1] sm:$0xff]
    %v31 = vld [vmem:[%s1 + $0x8] sm:$0xff]
    %v32 = vld [vmem:[%s2] sm:$0xff]
    %v33 = vld [vmem:[%s2 + $0x8] sm:$0xff]
    %v34 = vld [vmem:[%s2 + $0x10] sm:$0xff]
    %v35 = vld [vmem:[%s2 + $0x18] sm:$0xff]
    %v36 = vld [vmem:[%s2 + $0x20] sm:$0xff]
    %v37 = vld [vmem:[%s2 + $0x28] sm:$0xff]
    %v38 = vld [vmem:[%s2 + $0x30] sm:$0xff]
    %v39 = vld [vmem:[%s2 + $0x38] sm:$0xff]
    %v40 = vld [vmem:[%s2 + $0x40] sm:$0xff]
    %v41 = vld [vmem:[%s2 + $0x48] sm:$0xff]
    %v42 = vld [vmem:[%s2 + $0x50] sm:$0xff]
    %v43 = vld [vmem:[%s2 + $0x58] sm:$0xff]
    %v44 = vld [vmem:[%s2 + $0x60] sm:$0xff]
    %v45 = vld [vmem:[%s2 + $0x68] sm:$0xff]
    %v46 = vld [vmem:[%s2 + $0x70] sm:$0xff]
    %v47 = vld [vmem:[%s2 + $0x78] sm:$0xff]
    %v48 = vld [vmem:[%s2 + $0x80] sm:$0xff]
    %v49 = vld [vmem:[%s2 + $0x88] sm:$0xff]
    %v50 = vld [vmem:[%s2 + $0x90] sm:$0xff]
    %v51 = vld [vmem:[%s2 + $0x98] sm:$0xff]
    %v52 = vld [vmem:[%s2 + $0xa0] sm:$0xff]
    %v53 = vld [vmem:[%s2 + $0xa8] sm:$0xff]
    %v54 = vld [vmem:[%s2 + $0xb0] sm:$0xff]
    %v55 = vld [vmem:[%s2 + $0xb8] sm:$0xff]
    %v56 = vld [vmem:[%s2 + $0xc0] sm:$0xff]
    %v57 = vld [vmem:[%s2 + $0xc8] sm:$0xff]
    %v58 = vld [vmem:[%s2 + $0xd0] sm:$0xff]
    %v59 = vld [vmem:[%s2 + $0xd8] sm:$0xff]
    %v60 = vld [vmem:[%s2 + $0xe0] sm:$0xff]
    %v61 = vld [vmem:[%s2 + $0xe8] sm:$0xff]
    %v62 = vld [vmem:[%s2 + $0xf0] sm:$0xff]
    %v63 = vld [vmem:[%s2 + $0xf8] sm:$0xff]
    %v64 = vld [vmem:[%s3] sm:$0x3]
    %v65 = vld [vmem:[%s4] sm:$0xff]
    %v66 = vld [vmem:[%s4 + $0x8] sm:$0xff]
    %v67 = vld [vmem:[%s4 + $0x10] sm:$0xff]
    %v68 = vld [vmem:[%s4 + $0x18] sm:$0xff]
    %v69 = vld [vmem:[%s4 + $0x20] sm:$0xff]
    %v70 = vld [vmem:[%s4 + $0x28] sm:$0xff]
    %v71 = vld [vmem:[%s4 + $0x30] sm:$0xff]
    %v72 = vld [vmem:[%s4 + $0x38] sm:$0xff]
    %v73 = vld [vmem:[%s5] sm:$0x1]
    %v74 = vlaneseq
    %v75 = vshrl.u32 %v74, 7
    %v76 = vadd.s32 %v75, 8
    %vm77 = vcmp.lt.s32.totalorder %v75, 0
    %v78 = vsub.s32 0, %v75
    %v79 = vsel %vm77, %v78, %v75
    %v80 = vshrl.u32 %v79, 3
    %v81 = vand.u32 %v79, 7
    %v82 = vsub.s32 0, %v81
    %v83 = vsel %vm77, %v82, %v81
    %vm84 = vcmp.lt.s32.totalorder %v76, 0
    %v85 = vsub.s32 0, %v76
    %v86 = vsel %vm84, %v85, %v76
    %v87 = vshrl.u32 %v86, 3
    %v88 = vand.u32 %v86, 7
    %v89 = vsub.s32 0, %v88
    %v90 = vsel %vm84, %v89, %v88
    %vm91 = vcmp.ne.s32.totalorder %v83, 0
    %vm92 = vcmp.ne.s32.totalorder %v90, 0
    %vm93 = vcmp.lt.s32.totalorder %v83, 0
    %vm94 = vcmp.lt.s32.totalorder %v90, 0
    %vm95 = vmand %vm93, %vm91
    %vm96 = vmand %vm94, %vm92
    %v97 = vadd.s32 %v83, 8
    %v98 = vadd.s32 %v90, 8
    %v99 = vsel %vm95, %v97, %v83
    %v100 = vsel %vm96, %v98, %v90
    %vm101 = vcmp.eq.s32.totalorder %v99, 0
    %vm102 = vcmp.eq.s32.totalorder %v100, 0
    %vm103 = vcmp.eq.s32.totalorder %v99, 7
    %vm104 = vcmp.eq.s32.totalorder %v100, 7
    %vm105 = vcmask 261120
    %v106 = vsel %vm105, %v28, 0.0
    %v107 = vrot.slane %v106, 4
    %v108 = vadd.f32 %v106, %v107
    %v109 = vrot.slane %v108, 2
    %v110 = vadd.f32 %v108, %v109
    %v111 = vrot.slane %v110, 1
    %v112 = vadd.f32 %v110, %v111
    %v113 = vsel %vm105, %v29, 0.0
    %v114 = vrot.slane %v113, 4
    %v115 = vadd.f32 %v113, %v114
    %v116 = vrot.slane %v115, 2
    %v117 = vadd.f32 %v115, %v116
    %v118 = vrot.slane %v117, 1
    %v119 = vadd.f32 %v117, %v118
    %v120 = vrcp.pop 8.0
    %v121 = vmul.f32 %v112, %v120
    %v122 = vmul.f32 %v119, %v120
    %v123 = vsel %vm105, %v30, 0.0
    %v124 = vrot.slane %v123, 4
    %v125 = vadd.f32 %v123, %v124
    %v126 = vrot.slane %v125, 2
    %v127 = vadd.f32 %v125, %v126
    %v128 = vrot.slane %v127, 1
    %v129 = vadd.f32 %v127, %v128
    %v130 = vsel %vm105, %v31, 0.0
    %v131 = vrot.slane %v130, 4
    %v132 = vadd.f32 %v130, %v131
    %v133 = vrot.slane %v132, 2
    %v134 = vadd.f32 %v132, %v133
    %v135 = vrot.slane %v134, 1
    %v136 = vadd.f32 %v134, %v135
    %v137 = vmul.f32 %v129, %v120
    %v138 = vmul.f32 %v136, %v120
    %v139 = vrot.slane %v28, 7
    %v140 = vrot.slane %v29, 7
    %vm141 = vcmp.lt.s32.totalorder %v75, 1
    %v142 = vsel %vm141, %v139, %v140
    %v143 = vsel %vm141, %v140, %v139
    %v144 = vsel %vm101, 0.0, %v143
    %v145 = vsel %vm102, 0.0, %v142
    %v146 = vrot.slane %v28, 1
    %v147 = vrot.slane %v29, 1
    %vm148 = vcmp.lt.s32.totalorder %v75, 7
    %v149 = vsel %vm148, %v146, %v147
    %v150 = vsel %vm148, %v147, %v146
    %v151 = vsel %vm103, 0.0, %v149
    %v152 = vsel %vm104, 0.0, %v150
    %v153 = vrot.slane %v30, 7
    %v154 = vrot.slane %v31, 7
    %v155 = vsel %vm141, %v153, %v154
    %v156 = vsel %vm141, %v154, %v153
    %v157 = vsel %vm101, 0.0, %v156
    %v158 = vsel %vm102, 0.0, %v155
    %v159 = vrot.slane %v30, 1
    %v160 = vrot.slane %v31, 1
    %v161 = vsel %vm148, %v159, %v160
    %v162 = vsel %vm148, %v160, %v159
    %v163 = vsel %vm103, 0.0, %v161
    %v164 = vsel %vm104, 0.0, %v162
    %167 = vrot.lane.b32.xlu0 %v144, 32
    %v168 = vpop.permute.xlu0 %167
    %169 = vrot.lane.b32.xlu0 %v145, 32
    %v170 = vpop.permute.xlu0 %169
    %175 = vrot.lane.b32.xlu0 %v151, 64
    %v176 = vpop.permute.xlu0 %175
    %177 = vrot.lane.b32.xlu0 %v152, 64
    %v178 = vpop.permute.xlu0 %177
    %183 = vrot.lane.b32.xlu0 %v121, 96
    %v184 = vpop.permute.xlu0 %183
    %185 = vrot.lane.b32.xlu0 %v122, 96
    %v186 = vpop.permute.xlu0 %185
    %v189 = vsel %vm105, %v28, %v168
    %v190 = vsel %vm105, %v29, %v170
    %vm191 = vcmask 523264
    %v192 = vsel %vm191, %v189, %v176
    %v193 = vsel %vm191, %v190, %v178
    %vm194 = vcmask 785408
    %v195 = vsel %vm194, %v192, %v184
    %v196 = vsel %vm194, %v193, %v186
    %v198 = vlaneseq
    %v199 = vshrl.u32 %v198, 7
    %v200 = vsub.s32 0, %v199
    %v201 = vrot.slane %v64, %v200
    %v202 = vlaneseq
    %v203 = vshrl.u32 %v202, 7
    %v204 = vsub.s32 1, %v203
    %v205 = vrot.slane %v64, %v204
    %208 = vmatprep.subr.mxu0 %v33
    %209 = vmatpush1.msra.mxu0 %v32
    %210 = vmatprep.subr.mxu0 %v35
    %211 = vmatpush1.msra.mxu0 %v34
    %212 = vmatprep.subr.mxu0 %v37
    %213 = vmatpush1.msra.mxu0 %v36
    %214 = vmatprep.subr.mxu0 %v39
    %215 = vmatpush1.msra.mxu0 %v38
    %216 = vmatprep.subr.mxu0 %v41
    %217 = vmatpush1.msra.mxu0 %v40
    %218 = vmatprep.subr.mxu0 %v43
    %219 = vmatpush1.msra.mxu0 %v42
    %220 = vmatprep.subr.mxu0 %v45
    %221 = vmatpush1.msra.mxu0 %v44
    %222 = vmatprep.subr.mxu0 %v47
    %223 = vmatpush1.msra.mxu0 %v46
    %224 = vmatprep.subr.mxu0 %v49
    %225 = vmatpush1.msra.mxu0 %v48
    %226 = vmatprep.subr.mxu0 %v51
    %227 = vmatpush1.msra.mxu0 %v50
    %228 = vmatprep.subr.mxu0 %v53
    %229 = vmatpush1.msra.mxu0 %v52
    %230 = vmatprep.subr.mxu0 %v55
    %231 = vmatpush1.msra.mxu0 %v54
    %232 = vmatprep.subr.mxu0 %v57
    %233 = vmatpush1.msra.mxu0 %v56
    %234 = vmatprep.subr.mxu0 %v59
    %235 = vmatpush1.msra.mxu0 %v58
    %236 = vmatprep.subr.mxu0 %v61
    %237 = vmatpush1.msra.mxu0 %v60
    %238 = vmatprep.subr.mxu0 %v63
    %239 = vmatpush1.msra.mxu0 %v62
    %240 = vmatprep.subr.mxu0 0.0
    %241 = vmatpush1.msra.mxu0 0.0
    %242 = vmatprep.subr.mxu0 0.0
    %243 = vmatpush1.msra.mxu0 0.0
    %244 = vmatprep.subr.mxu0 0.0
    %245 = vmatpush1.msra.mxu0 0.0
    %246 = vmatprep.subr.mxu0 0.0
    %247 = vmatpush1.msra.mxu0 0.0
    %248 = vmatprep.subr.mxu0 0.0
    %249 = vmatpush1.msra.mxu0 0.0
    %250 = vmatprep.subr.mxu0 0.0
    %251 = vmatpush1.msra.mxu0 0.0
    %252 = vmatprep.subr.mxu0 0.0
    %253 = vmatpush1.msra.mxu0 0.0
    %254 = vmatprep.subr.mxu0 0.0
    %255 = vmatpush1.msra.mxu0 0.0
    %256 = vmatprep.subr.mxu0 0.0
    %257 = vmatpush1.msra.mxu0 0.0
    %258 = vmatprep.subr.mxu0 0.0
    %259 = vmatpush1.msra.mxu0 0.0
    %260 = vmatprep.subr.mxu0 0.0
    %261 = vmatpush1.msra.mxu0 0.0
    %262 = vmatprep.subr.mxu0 0.0
    %263 = vmatpush1.msra.mxu0 0.0
    %264 = vmatprep.subr.mxu0 0.0
    %265 = vmatpush1.msra.mxu0 0.0
    %266 = vmatprep.subr.mxu0 0.0
    %267 = vmatpush1.msra.mxu0 0.0
    %268 = vmatprep.subr.mxu0 0.0
    %269 = vmatpush1.msra.mxu0 0.0
    %270 = vmatprep.subr.mxu0 0.0
    %271 = vmatpush1.msra.mxu0 0.0
    %272 = vmatprep.mubr.f32.mxu0 0.0
    %273 = vmatmul.mubr.f32.gmra.mrb[0].mxu0 %v195
    %v274 = vpop.f32.mrb[0].mxu0
    %v275 = vadd.f32 %v201, %v274
    %v276 = vpop.f32.mrb[0].mxu0
    %v277 = vadd.f32 %v205, %v276
    %278 = vmatprep.mubr.f32.mxu0 0.0
    %279 = vmatmul.mubr.f32.gmra.mrb[0].mxu0 %v196
    %v280 = vpop.f32.mrb[0].mxu0
    %v281 = vadd.f32 %v201, %v280
    %v282 = vpop.f32.mrb[0].mxu0
    %v283 = vadd.f32 %v205, %v282
    %284 = vdwg.mxu0
    %v285 = vxor.u32 %v275, 2147483648
    %v286 = vxor.u32 %v277, 2147483648
    %v287 = vxor.u32 %v281, 2147483648
    %v288 = vxor.u32 %v283, 2147483648
    %v289 = vmul.f32 %v285, 1.442695
    %v290 = vpow.pop %v289
    %v291 = vmul.f32 %v286, 1.442695
    %v292 = vpow.pop %v291
    %v293 = vmul.f32 %v287, 1.442695
    %v294 = vpow.pop %v293
    %v295 = vmul.f32 %v288, 1.442695
    %v296 = vpow.pop %v295
    %v297 = vadd.f32 %v290, 1.0
    %v298 = vadd.f32 %v292, 1.0
    %v299 = vadd.f32 %v294, 1.0
    %v300 = vadd.f32 %v296, 1.0
    %v301 = vrcp.pop %v297
    %v302 = vmul.f32 1.0, %v301
    %v303 = vrcp.pop %v298
    %v304 = vmul.f32 1.0, %v303
    %v305 = vrcp.pop %v299
    %v306 = vmul.f32 1.0, %v305
    %v307 = vrcp.pop %v300
    %v308 = vmul.f32 1.0, %v307
    %vm309 = vcmask 1041409
    %v310 = vsel %vm309, %v122, %v121
    %312 = vrot.lane.b32.xlu0 %v310, 32
    %v313 = vpop.permute.xlu0 %312
    %v315 = vsel %vm105, %v310, %v313
    %v317 = vlaneseq
    %v318 = vshrl.u32 %v317, 7
    %v319 = vsub.s32 0, %v318
    %v320 = vrot.slane %v73, %v319
    %v323 = vsel %vm191, %v315, 0
    %325 = vmatprep.subr.mxu0 0.0
    %326 = vmatpush1.msra.mxu0 %v65
    %327 = vmatprep.subr.mxu0 0.0
    %328 = vmatpush1.msra.mxu0 %v66
    %329 = vmatprep.subr.mxu0 0.0
    %330 = vmatpush1.msra.mxu0 %v67
    %331 = vmatprep.subr.mxu0 0.0
    %332 = vmatpush1.msra.mxu0 %v68
    %333 = vmatprep.subr.mxu0 0.0
    %334 = vmatpush1.msra.mxu0 %v69
    %335 = vmatprep.subr.mxu0 0.0
    %336 = vmatpush1.msra.mxu0 %v70
    %337 = vmatprep.subr.mxu0 0.0
    %338 = vmatpush1.msra.mxu0 %v71
    %339 = vmatprep.subr.mxu0 0.0
    %340 = vmatpush1.msra.mxu0 %v72
    %341 = vmatprep.subr.mxu0 0.0
    %342 = vmatpush1.msra.mxu0 0.0
    %343 = vmatprep.subr.mxu0 0.0
    %344 = vmatpush1.msra.mxu0 0.0
    %345 = vmatprep.subr.mxu0 0.0
    %346 = vmatpush1.msra.mxu0 0.0
    %347 = vmatprep.subr.mxu0 0.0
    %348 = vmatpush1.msra.mxu0 0.0
    %349 = vmatprep.subr.mxu0 0.0
    %350 = vmatpush1.msra.mxu0 0.0
    %351 = vmatprep.subr.mxu0 0.0
    %352 = vmatpush1.msra.mxu0 0.0
    %353 = vmatprep.subr.mxu0 0.0
    %354 = vmatpush1.msra.mxu0 0.0
    %355 = vmatprep.subr.mxu0 0.0
    %356 = vmatpush1.msra.mxu0 0.0
    %357 = vmatprep.subr.mxu0 0.0
    %358 = vmatpush1.msra.mxu0 0.0
    %359 = vmatprep.subr.mxu0 0.0
    %360 = vmatpush1.msra.mxu0 0.0
    %361 = vmatprep.subr.mxu0 0.0
    %362 = vmatpush1.msra.mxu0 0.0
    %363 = vmatprep.subr.mxu0 0.0
    %364 = vmatpush1.msra.mxu0 0.0
    %365 = vmatprep.subr.mxu0 0.0
    %366 = vmatpush1.msra.mxu0 0.0
    %367 = vmatprep.subr.mxu0 0.0
    %368 = vmatpush1.msra.mxu0 0.0
    %369 = vmatprep.subr.mxu0 0.0
    %370 = vmatpush1.msra.mxu0 0.0
    %371 = vmatprep.subr.mxu0 0.0
    %372 = vmatpush1.msra.mxu0 0.0
    %373 = vmatprep.subr.mxu0 0.0
    %374 = vmatpush1.msra.mxu0 0.0
    %375 = vmatprep.subr.mxu0 0.0
    %376 = vmatpush1.msra.mxu0 0.0
    %377 = vmatprep.subr.mxu0 0.0
    %378 = vmatpush1.msra.mxu0 0.0
    %379 = vmatprep.subr.mxu0 0.0
    %380 = vmatpush1.msra.mxu0 0.0
    %381 = vmatprep.subr.mxu0 0.0
    %382 = vmatpush1.msra.mxu0 0.0
    %383 = vmatprep.subr.mxu0 0.0
    %384 = vmatpush1.msra.mxu0 0.0
    %385 = vmatprep.subr.mxu0 0.0
    %386 = vmatpush1.msra.mxu0 0.0
    %387 = vmatprep.subr.mxu0 0.0
    %388 = vmatpush1.msra.mxu0 0.0
    %389 = vmatprep.mubr.f32.mxu0 0.0
    %390 = vmatmul.mubr.f32.gmra.mrb[0].mxu0 %v323
    %v391 = vpop.f32.mrb[0].mxu0
    %v392 = vadd.f32 %v320, %v391
    %v393 = vpop.f32.mrb[0].mxu0
    %394 = vdwg.mxu0
    %v395 = vxor.u32 %v392, 2147483648
    %v396 = vmul.f32 %v395, 1.442695
    %v397 = vpow.pop %v396
    %v398 = vadd.f32 %v397, 1.0
    %v399 = vrcp.pop %v398
    %v400 = vmul.f32 1.0, %v399
    %403 = vrot.lane.b32.xlu0 %v30, 64
    %v404 = vpop.permute.xlu0 %403
    %405 = vrot.lane.b32.xlu0 %v31, 64
    %v406 = vpop.permute.xlu0 %405
    %v409 = vmul.f32 %v304, %v404
    %v410 = vmul.f32 %v308, %v406
    %vm411 = vcmask 785920
    %v412 = vsel %vm411, %v409, 0.0
    %v413 = vrot.slane %v412, 4
    %v414 = vadd.f32 %v412, %v413
    %v415 = vrot.slane %v414, 2
    %v416 = vadd.f32 %v414, %v415
    %v417 = vrot.slane %v416, 1
    %v418 = vadd.f32 %v416, %v417
    %v419 = vsel %vm411, %v410, 0.0
    %v420 = vrot.slane %v419, 4
    %v421 = vadd.f32 %v419, %v420
    %v422 = vrot.slane %v421, 2
    %v423 = vadd.f32 %v421, %v422
    %v424 = vrot.slane %v423, 1
    %v425 = vadd.f32 %v423, %v424
    %v428 = vsel %vm309, %v138, %v137
    %v430 = vmul.f32 %v400, %v428
    %v432 = vrot.slane %v430, 1
    %433 = vrot.lane.b32.xlu0 %v430, 64
    %v434 = vpop.permute.xlu0 %433
    %435 = vrot.lane.b32.xlu0 %v432, 64
    %v436 = vpop.permute.xlu0 %435
    %v439 = vadd.f32 %v418, %v434
    %v440 = vadd.f32 %v425, %v436
    %v441 = vtanh.pop %v439
    %v442 = vtanh.pop %v440
    %v445 = vrot.slane %v442, 7
    %v446 = vsel %vm309, %v445, %v441
    %447 = vrot.lane.b32.xlu0 %v446, 96
    %v448 = vpop.permute.xlu0 %447
    %v450 = vmul.f32 %v400, %v448
    %453 = vrot.lane.b32.xlu0 %v157, 32
    %v454 = vpop.permute.xlu0 %453
    %455 = vrot.lane.b32.xlu0 %v158, 32
    %v456 = vpop.permute.xlu0 %455
    %v459 = vmul.f32 %v302, %v454
    %v460 = vmul.f32 %v306, %v456
    %463 = vrot.lane.b32.xlu0 %v163, 64
    %v464 = vpop.permute.xlu0 %463
    %465 = vrot.lane.b32.xlu0 %v164, 64
    %v466 = vpop.permute.xlu0 %465
    %v469 = vmul.f32 %v302, %v464
    %v470 = vmul.f32 %v306, %v466
    %473 = vrot.lane.b32.xlu0 %v469, 96
    %v474 = vpop.permute.xlu0 %473
    %475 = vrot.lane.b32.xlu0 %v470, 96
    %v476 = vpop.permute.xlu0 %475
    %v479 = vadd.f32 %v459, %v474
    %v480 = vadd.f32 %v460, %v476
    %v481 = vadd.f32 %v302, %v304
    %v482 = vadd.f32 %v306, %v308
    %v483 = vmul.f32 %v481, %v30
    %v484 = vmul.f32 %v482, %v31
    %487 = vrot.lane.b32.xlu0 %v483, 32
    %v488 = vpop.permute.xlu0 %487
    %489 = vrot.lane.b32.xlu0 %v484, 32
    %v490 = vpop.permute.xlu0 %489
    %v493 = vadd.f32 %v479, %v488
    %v494 = vadd.f32 %v480, %v490
    %495 = vrot.lane.b32.xlu0 %v137, 96
    %v496 = vpop.permute.xlu0 %495
    %497 = vrot.lane.b32.xlu0 %v138, 96
    %v498 = vpop.permute.xlu0 %497
    %v501 = vmul.f32 %v302, %v496
    %v502 = vmul.f32 %v306, %v498
    %505 = vrot.lane.b32.xlu0 %v501, 64
    %v506 = vpop.permute.xlu0 %505
    %507 = vrot.lane.b32.xlu0 %v502, 64
    %v508 = vpop.permute.xlu0 %507
    %v511 = vadd.f32 %v493, %v506
    %v512 = vadd.f32 %v494, %v508
    %v513 = vtanh.pop %v511
    %v514 = vtanh.pop %v512
    %v515 = vmul.f32 %v304, %v513
    %v516 = vmul.f32 %v308, %v514
    %vm517 = vcmask 523520
    %v518 = vsel %vm517, %v515, 0.0
    %v519 = vrot.slane %v518, 4
    %v520 = vadd.f32 %v518, %v519
    %v521 = vrot.slane %v520, 2
    %v522 = vadd.f32 %v520, %v521
    %v523 = vrot.slane %v522, 1
    %v524 = vadd.f32 %v522, %v523
    %v525 = vsel %vm517, %v516, 0.0
    %v526 = vrot.slane %v525, 4
    %v527 = vadd.f32 %v525, %v526
    %v528 = vrot.slane %v527, 2
    %v529 = vadd.f32 %v527, %v528
    %v530 = vrot.slane %v529, 1
    %v531 = vadd.f32 %v529, %v530
    %v532 = vmul.f32 %v524, %v120
    %v533 = vmul.f32 %v531, %v120
    %536 = vrot.lane.b32.xlu0 %v515, 96
    %v537 = vpop.permute.xlu0 %536
    %538 = vrot.lane.b32.xlu0 %v516, 96
    %v539 = vpop.permute.xlu0 %538
    %v542 = vrot.slane %v537, 7
    %v543 = vrot.slane %v539, 7
    %v544 = vsel %vm141, %v542, %v543
    %v545 = vsel %vm141, %v543, %v542
    %v546 = vsel %vm101, 0.0, %v545
    %v547 = vsel %vm102, 0.0, %v544
    %v548 = vrot.slane %v537, 1
    %v549 = vrot.slane %v539, 1
    %v550 = vsel %vm148, %v548, %v549
    %v551 = vsel %vm148, %v549, %v548
    %v552 = vsel %vm103, 0.0, %v550
    %v553 = vsel %vm104, 0.0, %v551
    %556 = vrot.lane.b32.xlu0 %v511, 96
    %v557 = vpop.permute.xlu0 %556
    %558 = vrot.lane.b32.xlu0 %v512, 96
    %v559 = vpop.permute.xlu0 %558
    %v562 = vrot.slane %v557, 7
    %v563 = vrot.slane %v559, 7
    %v564 = vsel %vm141, %v562, %v563
    %v565 = vsel %vm141, %v563, %v562
    %v566 = vsel %vm101, 0.0, %v565
    %v567 = vsel %vm102, 0.0, %v564
    %v568 = vrot.slane %v557, 1
    %v569 = vrot.slane %v559, 1
    %v570 = vsel %vm148, %v568, %v569
    %v571 = vsel %vm148, %v569, %v568
    %v572 = vsel %vm103, 0.0, %v570
    %v573 = vsel %vm104, 0.0, %v571
    %v576 = vunpack.c.l.s4 1966171168
    %v577 = vunpack.c.0.s8 %v576
    %v578 = vlaneseq
    %v579 = vshrl.u32 %v578, 7
    %v580 = vsub.s32 %v577, %v579
    %v581 = vrot.slane %v450, %v580
    %v582 = vcombine.high %v581, %v581
    %v584 = vunpack.c.l.s4 1966171168
    %v585 = vunpack.c.0.s8 %v584
    %v586 = vlaneseq
    %v587 = vshrl.u32 %v586, 7
    %v588 = vsub.s32 %v585, %v587
    %v589 = vrot.slane %v581, %v588
    %v591 = vunpack.c.l.s4 1966171168
    %v592 = vunpack.c.0.s8 %v591
    %v593 = vlaneseq
    %v594 = vshrl.u32 %v593, 7
    %v595 = vsub.s32 %v592, %v594
    %v596 = vrot.slane %v582, %v595
    %v597 = vlaneseq
    %v598 = vshrl.u32 %v597, 7
    %v599 = vsub.s32 0, %v598
    %v600 = vrot.slane %v589, %v599
    %v601 = vlaneseq
    %v602 = vshrl.u32 %v601, 7
    %v603 = vsub.s32 0, %v602
    %v604 = vrot.slane %v596, %v603
    %v605 = vlaneseq
    %v606 = vshrl.u32 %v605, 7
    %v607 = vsub.s32 0, %v606
    %v608 = vrot.slane %v439, %v607
    %v609 = vlaneseq
    %v610 = vshrl.u32 %v609, 7
    %v611 = vsub.s32 0, %v610
    %v612 = vrot.slane %v440, %v611
    %615 = vrot.lane.b32.xlu0 %v546, 32
    %v616 = vpop.permute.xlu0 %615
    %617 = vrot.lane.b32.xlu0 %v547, 32
    %v618 = vpop.permute.xlu0 %617
    %623 = vrot.lane.b32.xlu0 %v552, 64
    %v624 = vpop.permute.xlu0 %623
    %625 = vrot.lane.b32.xlu0 %v553, 64
    %v626 = vpop.permute.xlu0 %625
    %629 = vrot.lane.b32.xlu0 %v600, 64
    %v630 = vpop.permute.xlu0 %629
    %631 = vrot.lane.b32.xlu0 %v604, 64
    %v632 = vpop.permute.xlu0 %631
    %v635 = vsel %vm105, %v537, %v616
    %v636 = vsel %vm105, %v539, %v618
    %v637 = vsel %vm191, %v635, %v624
    %v638 = vsel %vm191, %v636, %v626
    %v639 = vsel %vm194, %v637, %v630
    %v640 = vsel %vm194, %v638, %v632
    %641 = vmatprep.subr.mxu0 %v33
    %642 = vmatpush1.msra.mxu0 %v32
    %643 = vmatprep.subr.mxu0 %v35
    %644 = vmatpush1.msra.mxu0 %v34
    %645 = vmatprep.subr.mxu0 %v37
    %646 = vmatpush1.msra.mxu0 %v36
    %647 = vmatprep.subr.mxu0 %v39
    %648 = vmatpush1.msra.mxu0 %v38
    %649 = vmatprep.subr.mxu0 %v41
    %650 = vmatpush1.msra.mxu0 %v40
    %651 = vmatprep.subr.mxu0 %v43
    %652 = vmatpush1.msra.mxu0 %v42
    %653 = vmatprep.subr.mxu0 %v45
    %654 = vmatpush1.msra.mxu0 %v44
    %655 = vmatprep.subr.mxu0 %v47
    %656 = vmatpush1.msra.mxu0 %v46
    %657 = vmatprep.subr.mxu0 %v49
    %658 = vmatpush1.msra.mxu0 %v48
    %659 = vmatprep.subr.mxu0 %v51
    %660 = vmatpush1.msra.mxu0 %v50
    %661 = vmatprep.subr.mxu0 %v53
    %662 = vmatpush1.msra.mxu0 %v52
    %663 = vmatprep.subr.mxu0 %v55
    %664 = vmatpush1.msra.mxu0 %v54
    %665 = vmatprep.subr.mxu0 %v57
    %666 = vmatpush1.msra.mxu0 %v56
    %667 = vmatprep.subr.mxu0 %v59
    %668 = vmatpush1.msra.mxu0 %v58
    %669 = vmatprep.subr.mxu0 %v61
    %670 = vmatpush1.msra.mxu0 %v60
    %671 = vmatprep.subr.mxu0 %v63
    %672 = vmatpush1.msra.mxu0 %v62
    %673 = vmatprep.subr.mxu0 0.0
    %674 = vmatpush1.msra.mxu0 0.0
    %675 = vmatprep.subr.mxu0 0.0
    %676 = vmatpush1.msra.mxu0 0.0
    %677 = vmatprep.subr.mxu0 0.0
    %678 = vmatpush1.msra.mxu0 0.0
    %679 = vmatprep.subr.mxu0 0.0
    %680 = vmatpush1.msra.mxu0 0.0
    %681 = vmatprep.subr.mxu0 0.0
    %682 = vmatpush1.msra.mxu0 0.0
    %683 = vmatprep.subr.mxu0 0.0
    %684 = vmatpush1.msra.mxu0 0.0
    %685 = vmatprep.subr.mxu0 0.0
    %686 = vmatpush1.msra.mxu0 0.0
    %687 = vmatprep.subr.mxu0 0.0
    %688 = vmatpush1.msra.mxu0 0.0
    %689 = vmatprep.subr.mxu0 0.0
    %690 = vmatpush1.msra.mxu0 0.0
    %691 = vmatprep.subr.mxu0 0.0
    %692 = vmatpush1.msra.mxu0 0.0
    %693 = vmatprep.subr.mxu0 0.0
    %694 = vmatpush1.msra.mxu0 0.0
    %695 = vmatprep.subr.mxu0 0.0
    %696 = vmatpush1.msra.mxu0 0.0
    %697 = vmatprep.subr.mxu0 0.0
    %698 = vmatpush1.msra.mxu0 0.0
    %699 = vmatprep.subr.mxu0 0.0
    %700 = vmatpush1.msra.mxu0 0.0
    %701 = vmatprep.subr.mxu0 0.0
    %702 = vmatpush1.msra.mxu0 0.0
    %703 = vmatprep.subr.mxu0 0.0
    %704 = vmatpush1.msra.mxu0 0.0
    %705 = vmatprep.mubr.f32.mxu0 0.0
    %706 = vmatmul.mubr.f32.gmra.mrb[0].mxu0 %v639
    %v707 = vpop.f32.mrb[0].mxu0
    %v708 = vadd.f32 %v201, %v707
    %v709 = vpop.f32.mrb[0].mxu0
    %v710 = vadd.f32 %v205, %v709
    %711 = vmatprep.mubr.f32.mxu0 0.0
    %712 = vmatmul.mubr.f32.gmra.mrb[0].mxu0 %v640
    %v713 = vpop.f32.mrb[0].mxu0
    %v714 = vadd.f32 %v201, %v713
    %v715 = vpop.f32.mrb[0].mxu0
    %v716 = vadd.f32 %v205, %v715
    %717 = vdwg.mxu0
    %v718 = vxor.u32 %v708, 2147483648
    %v719 = vxor.u32 %v710, 2147483648
    %v720 = vxor.u32 %v714, 2147483648
    %v721 = vxor.u32 %v716, 2147483648
    %v722 = vmul.f32 %v718, 1.442695
    %v723 = vpow.pop %v722
    %v724 = vmul.f32 %v719, 1.442695
    %v725 = vpow.pop %v724
    %v726 = vmul.f32 %v720, 1.442695
    %v727 = vpow.pop %v726
    %v728 = vmul.f32 %v721, 1.442695
    %v729 = vpow.pop %v728
    %v730 = vadd.f32 %v723, 1.0
    %v731 = vadd.f32 %v725, 1.0
    %v732 = vadd.f32 %v727, 1.0
    %v733 = vadd.f32 %v729, 1.0
    %v734 = vrcp.pop %v730
    %v735 = vmul.f32 1.0, %v734
    %v736 = vrcp.pop %v731
    %v737 = vmul.f32 1.0, %v736
    %v738 = vrcp.pop %v732
    %v739 = vmul.f32 1.0, %v738
    %v740 = vrcp.pop %v733
    %v741 = vmul.f32 1.0, %v740
    %742 = vrot.lane.b32.xlu0 %v450, 96
    %v743 = vpop.permute.xlu0 %742
    %v747 = vsel %vm309, %v533, %v532
    %v749 = vsel %vm105, %v743, %v747
    %v751 = vsel %vm191, %v749, 0
    %753 = vmatprep.subr.mxu0 0.0
    %754 = vmatpush1.msra.mxu0 %v65
    %755 = vmatprep.subr.mxu0 0.0
    %756 = vmatpush1.msra.mxu0 %v66
    %757 = vmatprep.subr.mxu0 0.0
    %758 = vmatpush1.msra.mxu0 %v67
    %759 = vmatprep.subr.mxu0 0.0
    %760 = vmatpush1.msra.mxu0 %v68
    %761 = vmatprep.subr.mxu0 0.0
    %762 = vmatpush1.msra.mxu0 %v69
    %763 = vmatprep.subr.mxu0 0.0
    %764 = vmatpush1.msra.mxu0 %v70
    %765 = vmatprep.subr.mxu0 0.0
    %766 = vmatpush1.msra.mxu0 %v71
    %767 = vmatprep.subr.mxu0 0.0
    %768 = vmatpush1.msra.mxu0 %v72
    %769 = vmatprep.subr.mxu0 0.0
    %770 = vmatpush1.msra.mxu0 0.0
    %771 = vmatprep.subr.mxu0 0.0
    %772 = vmatpush1.msra.mxu0 0.0
    %773 = vmatprep.subr.mxu0 0.0
    %774 = vmatpush1.msra.mxu0 0.0
    %775 = vmatprep.subr.mxu0 0.0
    %776 = vmatpush1.msra.mxu0 0.0
    %777 = vmatprep.subr.mxu0 0.0
    %778 = vmatpush1.msra.mxu0 0.0
    %779 = vmatprep.subr.mxu0 0.0
    %780 = vmatpush1.msra.mxu0 0.0
    %781 = vmatprep.subr.mxu0 0.0
    %782 = vmatpush1.msra.mxu0 0.0
    %783 = vmatprep.subr.mxu0 0.0
    %784 = vmatpush1.msra.mxu0 0.0
    %785 = vmatprep.subr.mxu0 0.0
    %786 = vmatpush1.msra.mxu0 0.0
    %787 = vmatprep.subr.mxu0 0.0
    %788 = vmatpush1.msra.mxu0 0.0
    %789 = vmatprep.subr.mxu0 0.0
    %790 = vmatpush1.msra.mxu0 0.0
    %791 = vmatprep.subr.mxu0 0.0
    %792 = vmatpush1.msra.mxu0 0.0
    %793 = vmatprep.subr.mxu0 0.0
    %794 = vmatpush1.msra.mxu0 0.0
    %795 = vmatprep.subr.mxu0 0.0
    %796 = vmatpush1.msra.mxu0 0.0
    %797 = vmatprep.subr.mxu0 0.0
    %798 = vmatpush1.msra.mxu0 0.0
    %799 = vmatprep.subr.mxu0 0.0
    %800 = vmatpush1.msra.mxu0 0.0
    %801 = vmatprep.subr.mxu0 0.0
    %802 = vmatpush1.msra.mxu0 0.0
    %803 = vmatprep.subr.mxu0 0.0
    %804 = vmatpush1.msra.mxu0 0.0
    %805 = vmatprep.subr.mxu0 0.0
    %806 = vmatpush1.msra.mxu0 0.0
    %807 = vmatprep.subr.mxu0 0.0
    %808 = vmatpush1.msra.mxu0 0.0
    %809 = vmatprep.subr.mxu0 0.0
    %810 = vmatpush1.msra.mxu0 0.0
    %811 = vmatprep.subr.mxu0 0.0
    %812 = vmatpush1.msra.mxu0 0.0
    %813 = vmatprep.subr.mxu0 0.0
    %814 = vmatpush1.msra.mxu0 0.0
    %815 = vmatprep.subr.mxu0 0.0
    %816 = vmatpush1.msra.mxu0 0.0
    %817 = vmatprep.mubr.f32.mxu0 0.0
    %818 = vmatmul.mubr.f32.gmra.mrb[0].mxu0 %v751
    %v819 = vpop.f32.mrb[0].mxu0
    %v820 = vadd.f32 %v320, %v819
    %v821 = vpop.f32.mrb[0].mxu0
    %822 = vdwg.mxu0
    %v823 = vxor.u32 %v820, 2147483648
    %v824 = vmul.f32 %v823, 1.442695
    %v825 = vpow.pop %v824
    %v826 = vadd.f32 %v825, 1.0
    %v827 = vrcp.pop %v826
    %v828 = vmul.f32 1.0, %v827
    %829 = vrot.lane.b32.xlu0 %v511, 32
    %v830 = vpop.permute.xlu0 %829
    %831 = vrot.lane.b32.xlu0 %v512, 32
    %v832 = vpop.permute.xlu0 %831
    %v835 = vmul.f32 %v737, %v830
    %v836 = vmul.f32 %v741, %v832
    %v837 = vsel %vm411, %v835, 0.0
    %v838 = vrot.slane %v837, 4
    %v839 = vadd.f32 %v837, %v838
    %v840 = vrot.slane %v839, 2
    %v841 = vadd.f32 %v839, %v840
    %v842 = vrot.slane %v841, 1
    %v843 = vadd.f32 %v841, %v842
    %v844 = vsel %vm411, %v836, 0.0
    %v845 = vrot.slane %v844, 4
    %v846 = vadd.f32 %v844, %v845
    %v847 = vrot.slane %v846, 2
    %v848 = vadd.f32 %v846, %v847
    %v849 = vrot.slane %v848, 1
    %v850 = vadd.f32 %v848, %v849
    %v853 = vrot.slane %v440, 7
    %v854 = vsel %vm309, %v853, %v439
    %855 = vrot.lane.b32.xlu0 %v854, 64
    %v856 = vpop.permute.xlu0 %855
    %v858 = vmul.f32 %v828, %v856
    %v860 = vrot.slane %v858, 1
    %861 = vrot.lane.b32.xlu0 %v858, 64
    %v862 = vpop.permute.xlu0 %861
    %863 = vrot.lane.b32.xlu0 %v860, 64
    %v864 = vpop.permute.xlu0 %863
    %v867 = vadd.f32 %v843, %v862
    %v868 = vadd.f32 %v850, %v864
    %v869 = vtanh.pop %v867
    %v870 = vtanh.pop %v868
    %v873 = vrot.slane %v870, 7
    %v874 = vsel %vm309, %v873, %v869
    %875 = vrot.lane.b32.xlu0 %v874, 96
    %v876 = vpop.permute.xlu0 %875
    %v878 = vmul.f32 %v828, %v876
    %881 = vrot.lane.b32.xlu0 %v566, 32
    %v882 = vpop.permute.xlu0 %881
    %883 = vrot.lane.b32.xlu0 %v567, 32
    %v884 = vpop.permute.xlu0 %883
    %v887 = vmul.f32 %v735, %v882
    %v888 = vmul.f32 %v739, %v884
    %891 = vrot.lane.b32.xlu0 %v572, 64
    %v892 = vpop.permute.xlu0 %891
    %893 = vrot.lane.b32.xlu0 %v573, 64
    %v894 = vpop.permute.xlu0 %893
    %v897 = vmul.f32 %v735, %v892
    %v898 = vmul.f32 %v739, %v894
    %901 = vrot.lane.b32.xlu0 %v897, 96
    %v902 = vpop.permute.xlu0 %901
    %903 = vrot.lane.b32.xlu0 %v898, 96
    %v904 = vpop.permute.xlu0 %903
    %v907 = vadd.f32 %v887, %v902
    %v908 = vadd.f32 %v888, %v904
    %v909 = vadd.f32 %v735, %v737
    %v910 = vadd.f32 %v739, %v741
    %v911 = vmul.f32 %v909, %v557
    %v912 = vmul.f32 %v910, %v559
    %915 = vrot.lane.b32.xlu0 %v911, 32
    %v916 = vpop.permute.xlu0 %915
    %917 = vrot.lane.b32.xlu0 %v912, 32
    %v918 = vpop.permute.xlu0 %917
    %v921 = vadd.f32 %v907, %v916
    %v922 = vadd.f32 %v908, %v918
    %925 = vrot.lane.b32.xlu0 %v608, 32
    %v926 = vpop.permute.xlu0 %925
    %927 = vrot.lane.b32.xlu0 %v612, 32
    %v928 = vpop.permute.xlu0 %927
    %v931 = vmul.f32 %v735, %v926
    %v932 = vmul.f32 %v739, %v928
    %935 = vrot.lane.b32.xlu0 %v931, 64
    %v936 = vpop.permute.xlu0 %935
    %937 = vrot.lane.b32.xlu0 %v932, 64
    %v938 = vpop.permute.xlu0 %937
    %v941 = vadd.f32 %v921, %v936
    %v942 = vadd.f32 %v922, %v938
    %v943 = vtanh.pop %v941
    %v944 = vtanh.pop %v942
    %v945 = vmul.f32 %v737, %v943
    %v946 = vmul.f32 %v741, %v944
    %949 = vrot.lane.b32.xlu0 %v945, 96
    %v950 = vpop.permute.xlu0 %949
    %951 = vrot.lane.b32.xlu0 %v946, 96
    %v952 = vpop.permute.xlu0 %951
    %955 = vst.msk [vmem:[#allocation2] sm:$0xff] %vm105, %v950
    %956 = vst.msk [vmem:[#allocation2 + $0x8] sm:$0xff] %vm105, %v952
    %959 = vrot.lane.b32.xlu0 %v941, 96
    %v960 = vpop.permute.xlu0 %959
    %961 = vrot.lane.b32.xlu0 %v942, 96
    %v962 = vpop.permute.xlu0 %961
    %965 = vst.msk [vmem:[#allocation4] sm:$0xff] %vm105, %v960
    %966 = vst.msk [vmem:[#allocation4 + $0x8] sm:$0xff] %vm105, %v962
    %v969 = vunpack.c.l.s4 1966171168
    %v970 = vunpack.c.0.s8 %v969
    %v971 = vlaneseq
    %v972 = vshrl.u32 %v971, 7
    %v973 = vsub.s32 %v970, %v972
    %v974 = vrot.slane %v878, %v973
    %v975 = vcombine.high %v974, %v974
    %v977 = vunpack.c.l.s4 1966171168
    %v978 = vunpack.c.0.s8 %v977
    %v979 = vlaneseq
    %v980 = vshrl.u32 %v979, 7
    %v981 = vsub.s32 %v978, %v980
    %v982 = vrot.slane %v974, %v981
    %v984 = vunpack.c.l.s4 1966171168
    %v985 = vunpack.c.0.s8 %v984
    %v986 = vlaneseq
    %v987 = vshrl.u32 %v986, 7
    %v988 = vsub.s32 %v985, %v987
    %v989 = vrot.slane %v975, %v988
    %v990 = vlaneseq
    %v991 = vshrl.u32 %v990, 7
    %v992 = vsub.s32 0, %v991
    %v993 = vrot.slane %v982, %v992
    %v994 = vlaneseq
    %v995 = vshrl.u32 %v994, 7
    %v996 = vsub.s32 0, %v995
    %v997 = vrot.slane %v989, %v996
    %998 = vrot.lane.b32.xlu0 %v993, 96
    %v999 = vpop.permute.xlu0 %998
    %1000 = vrot.lane.b32.xlu0 %v997, 96
    %v1001 = vpop.permute.xlu0 %1000
    %vm1004 = vcmask 253952
    %1005 = vst.msk [vmem:[#allocation6] sm:$0x1] %vm1004, %v999
    %1006 = vst.msk [vmem:[#allocation6 + $0x1] sm:$0x1] %vm1004, %v1001
    // Predicated region
    $region26: #{tpu_custom_call.1} parent=1 // pred_check
      _
    $region27: #{tpu_custom_call.1} parent=1 // pred_check_branch
      %1008 = sbr.rel (0) target = $region29
    $region28: #{tpu_custom_call.1} parent=1 // pred_region
      %s1010 = ssub.s32 256, 256
      %1011 = vsyncadd [#allocation3], %s1010
      %s1012 = sshll.u32 [#allocation2], 4
      %s1013 = int_to_ptr.vmem [resolvable:$true] %s1012
      %1018 = dma.vmem_to_hbm [thread:$0]  %s1013, 256, %s6, [#allocation3], 128, 128, 8
    $region29: #{tpu_custom_call.1} parent=1 // pred_fallthru
      _
    // Predicated region
    $region30: #{tpu_custom_call.1} parent=1 // pred_check
      _
    $region31: #{tpu_custom_call.1} parent=1 // pred_check_branch
      %1020 = sbr.rel (0) target = $region33
    $region32: #{tpu_custom_call.1} parent=1 // pred_region
      %s1022 = ssub.s32 256, 256
      %1023 = vsyncadd [#allocation5], %s1022
      %s1024 = sshll.u32 [#allocation4], 4
      %s1025 = int_to_ptr.vmem [resolvable:$true] %s1024
      %1030 = dma.vmem_to_hbm [thread:$0]  %s1025, 256, %s7, [#allocation5], 128, 128, 8
    $region33: #{tpu_custom_call.1} parent=1 // pred_fallthru
      _
    // Predicated region
    $region34: #{tpu_custom_call.1} parent=1 // pred_check
      _
    $region35: #{tpu_custom_call.1} parent=1 // pred_check_branch
      %1032 = sbr.rel (0) target = $region37
    $region36: #{tpu_custom_call.1} parent=1 // pred_region
      %s1034 = ssub.s32 32, 32
      %1035 = vsyncadd [#allocation5], %s1034
      %s1036 = sshll.u32 [#allocation6], 4
      %s1037 = int_to_ptr.vmem [resolvable:$true] %s1036
      %1042 = dma.vmem_to_hbm [thread:$0]  %s1037, 32, %s8, [#allocation5], 16, 16, 1
    $region37: #{tpu_custom_call.1} parent=1 // pred_fallthru
      _
    // Predicated region
    $region38: #{tpu_custom_call.1} parent=1 // pred_check
      _
    $region39: #{tpu_custom_call.1} parent=1 // pred_check_branch
      %1044 = sbr.rel (0) target = $region41
    $region40: #{tpu_custom_call.1} parent=1 // pred_region
      %1045 = dma.done [#allocation3], 256
    $region41: #{tpu_custom_call.1} parent=1 // pred_fallthru
      _
    // Predicated region
    $region42: #{tpu_custom_call.1} parent=1 // pred_check
      _
    $region43: #{tpu_custom_call.1} parent=1 // pred_check_branch
      %1047 = sbr.rel (0) target = $region45
    $region44: #{tpu_custom_call.1} parent=1 // pred_region
      %1048 = dma.done [#allocation5], 256
    $region45: #{tpu_custom_call.1} parent=1 // pred_fallthru
      _
    // Predicated region
    $region46: #{tpu_custom_call.1} parent=1 // pred_check
      _
    $region47: #{tpu_custom_call.1} parent=1 // pred_check_branch
      %1050 = sbr.rel (0) target = $region49
    $region48: #{tpu_custom_call.1} parent=1 // pred_region
      %1051 = dma.done [#allocation5], 32
    $region49: #{tpu_custom_call.1} parent=1 // pred_fallthru
      _
    %1052 = vsyncpa [#allocation3], 1
    %1053 = vsyncpa [#allocation5], 1

// kernel: tpu_custom_call.1
$region0: #{tpu_custom_call.1}
  #allocation0 [shape = 'u32[]', space=smem, size = 0x4, offset = 0x4, fixed_abs, tag = 'smem constant byte address 0x4 - core index']
  #allocation1 [shape = 'u32[144,128]{1,0:T(1,128)}', space=vmem, size = 0x12000, scoped, tag = 'internal scratch']
  %s0 = inlined_call_operand.vmem [shape: f32[2,8,32], index: 0, kind: input, shape index: {}]
  %s1 = inlined_call_operand.vmem [shape: f32[2,8,32], index: 1, kind: input, shape index: {}]
  %s2 = inlined_call_operand.vmem [shape: f32[128,224], index: 2, kind: input, shape index: {}]
  %s3 = inlined_call_operand.vmem [shape: f32[1,224], index: 3, kind: input, shape index: {}]
  %s4 = inlined_call_operand.vmem [shape: f32[64,64], index: 4, kind: input, shape index: {}]
  %s5 = inlined_call_operand.vmem [shape: f32[1,64], index: 5, kind: input, shape index: {}]
  %s6 = inlined_call_operand.hbm [shape: f32[2,8,32], index: 6, kind: output, shape index: {0}]
  %s7 = inlined_call_operand.hbm [shape: f32[2,8,32], index: 7, kind: output, shape index: {1}]
  %s8 = inlined_call_operand.hbm [shape: f32[2,1,32], index: 8, kind: output, shape index: {2}]
  %9 = xla_tuple %s6, %s7, %s8
  %s10 = sld [smem:[#allocation0]]
  $region50: #{tpu_custom_call.1} parent=0
    _
  %s12 = ssub.s32 1, %s10
  %s13 = scalar_select 0, %s12, %s10
  $region1: #{tpu_custom_call.1} parent=0
    #allocation2 [shape = 'u8[8192]{0}', space=vmem, size = 0x2000, scoped, tag = 'output window, operand 0, single buffered']
    #allocation3 [shape = 's32[1]{0}', space=sflag, size = 0x4, scoped, tag = 'scoped memory for tpu_custom_call.1']
    #allocation4 [shape = 'u8[8192]{0}', space=vmem, size = 0x2000, scoped, tag = 'output window, operand 1, single buffered']
    #allocation5 [shape = 's32[1]{0}', space=sflag, size = 0x4, scoped, tag = 'scoped memory for tpu_custom_call.1']
    #allocation6 [shape = 'u8[1024]{0}', space=vmem, size = 0x400, scoped, tag = 'output window, operand 2, single buffered']
    %14 = vsyncpa [#allocation3], 0
    %15 = vsyncpa [#allocation5], 0
    // Predicated region
    $region2: #{tpu_custom_call.1} parent=1 // pred_check
      _
    $region3: #{tpu_custom_call.1} parent=1 // pred_check_branch
      %17 = sbr.rel (0) target = $region5
    $region4: #{tpu_custom_call.1} parent=1 // pred_region
      _
    $region5: #{tpu_custom_call.1} parent=1 // pred_fallthru
      _
    // Predicated region
    $region6: #{tpu_custom_call.1} parent=1 // pred_check
      _
    $region7: #{tpu_custom_call.1} parent=1 // pred_check_branch
      %19 = sbr.rel (0) target = $region9
    $region8: #{tpu_custom_call.1} parent=1 // pred_region
      _
    $region9: #{tpu_custom_call.1} parent=1 // pred_fallthru
      _
    // Predicated region
    $region10: #{tpu_custom_call.1} parent=1 // pred_check
      _
    $region11: #{tpu_custom_call.1} parent=1 // pred_check_branch
      %21 = sbr.rel (0) target = $region13
    $region12: #{tpu_custom_call.1} parent=1 // pred_region
      _
    $region13: #{tpu_custom_call.1} parent=1 // pred_fallthru
      _
    // Predicated region
    $region14: #{tpu_custom_call.1} parent=1 // pred_check
      _
    $region15: #{tpu_custom_call.1} parent=1 // pred_check_branch
      %23 = sbr.rel (0) target = $region17
    $region16: #{tpu_custom_call.1} parent=1 // pred_region
      _
    $region17: #{tpu_custom_call.1} parent=1 // pred_fallthru
      _
    // Predicated region
    $region18: #{tpu_custom_call.1} parent=1 // pred_check
      _
    $region19: #{tpu_custom_call.1} parent=1 // pred_check_branch
      %25 = sbr.rel (0) target = $region21
    $region20: #{tpu_custom_call.1} parent=1 // pred_region
      _
    $region21: #{tpu_custom_call.1} parent=1 // pred_fallthru
      _
    // Predicated region
    $region22: #{tpu_custom_call.1} parent=1 // pred_check
      _
    $region23: #{tpu_custom_call.1} parent=1 // pred_check_branch
      %27 = sbr.rel (0) target = $region25
    $region24: #{tpu_custom_call.1} parent=1 // pred_region
      _
    $region25: #{tpu_custom_call.1} parent=1 // pred_fallthru
      _
    %v28 = vld [vmem:[%s0] sm:$0xff]
    %v29 = vld [vmem:[%s0 + $0x8] sm:$0xff]
    %v30 = vld [vmem:[%s1] sm:$0xff]
    %v31 = vld [vmem:[%s1 + $0x8] sm:$0xff]
    %v32 = vld [vmem:[%s2] sm:$0xff]
    %v33 = vld [vmem:[%s2 + $0x8] sm:$0xff]
    %v34 = vld [vmem:[%s2 + $0x10] sm:$0xff]
    %v35 = vld [vmem:[%s2 + $0x18] sm:$0xff]
    %v36 = vld [vmem:[%s2 + $0x20] sm:$0xff]
    %v37 = vld [vmem:[%s2 + $0x28] sm:$0xff]
    %v38 = vld [vmem:[%s2 + $0x30] sm:$0xff]
    %v39 = vld [vmem:[%s2 + $0x38] sm:$0xff]
    %v40 = vld [vmem:[%s2 + $0x40] sm:$0xff]
    %v41 = vld [vmem:[%s2 + $0x48] sm:$0xff]
    %v42 = vld [vmem:[%s2 + $0x50] sm:$0xff]
    %v43 = vld [vmem:[%s2 + $0x58] sm:$0xff]
    %v44 = vld [vmem:[%s2 + $0x60] sm:$0xff]
    %v45 = vld [vmem:[%s2 + $0x68] sm:$0xff]
    %v46 = vld [vmem:[%s2 + $0x70] sm:$0xff]
    %v47 = vld [vmem:[%s2 + $0x78] sm:$0xff]
    %v48 = vld [vmem:[%s2 + $0x80] sm:$0xff]
    %v49 = vld [vmem:[%s2 + $0x88] sm:$0xff]
    %v50 = vld [vmem:[%s2 + $0x90] sm:$0xff]
    %v51 = vld [vmem:[%s2 + $0x98] sm:$0xff]
    %v52 = vld [vmem:[%s2 + $0xa0] sm:$0xff]
    %v53 = vld [vmem:[%s2 + $0xa8] sm:$0xff]
    %v54 = vld [vmem:[%s2 + $0xb0] sm:$0xff]
    %v55 = vld [vmem:[%s2 + $0xb8] sm:$0xff]
    %v56 = vld [vmem:[%s2 + $0xc0] sm:$0xff]
    %v57 = vld [vmem:[%s2 + $0xc8] sm:$0xff]
    %v58 = vld [vmem:[%s2 + $0xd0] sm:$0xff]
    %v59 = vld [vmem:[%s2 + $0xd8] sm:$0xff]
    %v60 = vld [vmem:[%s2 + $0xe0] sm:$0xff]
    %v61 = vld [vmem:[%s2 + $0xe8] sm:$0xff]
    %v62 = vld [vmem:[%s2 + $0xf0] sm:$0xff]
    %v63 = vld [vmem:[%s2 + $0xf8] sm:$0xff]
    %v64 = vld [vmem:[%s3] sm:$0x3]
    %v65 = vld [vmem:[%s4] sm:$0xff]
    %v66 = vld [vmem:[%s4 + $0x8] sm:$0xff]
    %v67 = vld [vmem:[%s4 + $0x10] sm:$0xff]
    %v68 = vld [vmem:[%s4 + $0x18] sm:$0xff]
    %v69 = vld [vmem:[%s4 + $0x20] sm:$0xff]
    %v70 = vld [vmem:[%s4 + $0x28] sm:$0xff]
    %v71 = vld [vmem:[%s4 + $0x30] sm:$0xff]
    %v72 = vld [vmem:[%s4 + $0x38] sm:$0xff]
    %v73 = vld [vmem:[%s5] sm:$0x1]
    %v74 = vlaneseq
    %v75 = vshrl.u32 %v74, 7
    %v76 = vadd.s32 %v75, 8
    %vm77 = vcmp.lt.s32.totalorder %v75, 0
    %v78 = vsub.s32 0, %v75
    %v79 = vsel %vm77, %v78, %v75
    %v80 = vshrl.u32 %v79, 3
    %v81 = vand.u32 %v79, 7
    %v82 = vsub.s32 0, %v81
    %v83 = vsel %vm77, %v82, %v81
    %vm84 = vcmp.lt.s32.totalorder %v76, 0
    %v85 = vsub.s32 0, %v76
    %v86 = vsel %vm84, %v85, %v76
    %v87 = vshrl.u32 %v86, 3
    %v88 = vand.u32 %v86, 7
    %v89 = vsub.s32 0, %v88
    %v90 = vsel %vm84, %v89, %v88
    %vm91 = vcmp.ne.s32.totalorder %v83, 0
    %vm92 = vcmp.ne.s32.totalorder %v90, 0
    %vm93 = vcmp.lt.s32.totalorder %v83, 0
    %vm94 = vcmp.lt.s32.totalorder %v90, 0
    %vm95 = vmand %vm93, %vm91
    %vm96 = vmand %vm94, %vm92
    %v97 = vadd.s32 %v83, 8
    %v98 = vadd.s32 %v90, 8
    %v99 = vsel %vm95, %v97, %v83
    %v100 = vsel %vm96, %v98, %v90
    %vm101 = vcmp.eq.s32.totalorder %v99, 0
    %vm102 = vcmp.eq.s32.totalorder %v100, 0
    %vm103 = vcmp.eq.s32.totalorder %v99, 7
    %vm104 = vcmp.eq.s32.totalorder %v100, 7
    %vm105 = vcmask 261120
    %v106 = vsel %vm105, %v28, 0.0
    %v107 = vrot.slane %v106, 4
    %v108 = vadd.f32 %v106, %v107
    %v109 = vrot.slane %v108, 2
    %v110 = vadd.f32 %v108, %v109
    %v111 = vrot.slane %v110, 1
    %v112 = vadd.f32 %v110, %v111
    %v113 = vsel %vm105, %v29, 0.0
    %v114 = vrot.slane %v113, 4
    %v115 = vadd.f32 %v113, %v114
    %v116 = vrot.slane %v115, 2
    %v117 = vadd.f32 %v115, %v116
    %v118 = vrot.slane %v117, 1
    %v119 = vadd.f32 %v117, %v118
    %v120 = vrcp.pop 8.0
    %v121 = vmul.f32 %v112, %v120
    %v122 = vmul.f32 %v119, %v120
    %v123 = vsel %vm105, %v30, 0.0
    %v124 = vrot.slane %v123, 4
    %v125 = vadd.f32 %v123, %v124
    %v126 = vrot.slane %v125, 2
    %v127 = vadd.f32 %v125, %v126
    %v128 = vrot.slane %v127, 1
    %v129 = vadd.f32 %v127, %v128
    %v130 = vsel %vm105, %v31, 0.0
    %v131 = vrot.slane %v130, 4
    %v132 = vadd.f32 %v130, %v131
    %v133 = vrot.slane %v132, 2
    %v134 = vadd.f32 %v132, %v133
    %v135 = vrot.slane %v134, 1
    %v136 = vadd.f32 %v134, %v135
    %v137 = vmul.f32 %v129, %v120
    %v138 = vmul.f32 %v136, %v120
    %vm141 = vcmask 1040384
    %v142 = vrot.slane %v28, 7
    %v143 = vrot.slane %v29, 7
    %v144 = vsel %vm141, %v142, %v143
    %v147 = vsel %vm141, 0.0, %v142
    %v148 = vsel %vm101, 0.0, %v147
    %v149 = vsel %vm102, 0.0, %v144
    %vm150 = vcmask 1046528
    %v151 = vrot.slane %v28, 1
    %v152 = vrot.slane %v29, 1
    %v153 = vsel %vm150, %v151, %v152
    %v156 = vsel %vm150, %v152, 0.0
    %v157 = vsel %vm103, 0.0, %v153
    %v158 = vsel %vm104, 0.0, %v156
    %v161 = vrot.slane %v30, 7
    %v162 = vrot.slane %v31, 7
    %v163 = vsel %vm141, %v161, %v162
    %v166 = vsel %vm141, 0.0, %v161
    %v167 = vsel %vm101, 0.0, %v166
    %v168 = vsel %vm102, 0.0, %v163
    %v169 = vrot.slane %v30, 1
    %v170 = vrot.slane %v31, 1
    %v171 = vsel %vm150, %v169, %v170
    %v174 = vsel %vm150, %v170, 0.0
    %v175 = vsel %vm103, 0.0, %v171
    %v176 = vsel %vm104, 0.0, %v174
    %179 = vrot.lane.b32.xlu0 %v148, 32
    %v180 = vpop.permute.xlu0 %179
    %181 = vrot.lane.b32.xlu0 %v149, 32
    %v182 = vpop.permute.xlu0 %181
    %187 = vrot.lane.b32.xlu0 %v157, 64
    %v188 = vpop.permute.xlu0 %187
    %189 = vrot.lane.b32.xlu0 %v158, 64
    %v190 = vpop.permute.xlu0 %189
    %195 = vrot.lane.b32.xlu0 %v121, 96
    %v196 = vpop.permute.xlu0 %195
    %197 = vrot.lane.b32.xlu0 %v122, 96
    %v198 = vpop.permute.xlu0 %197
    %v201 = vsel %vm105, %v28, %v180
    %v202 = vsel %vm105, %v29, %v182
    %vm203 = vcmask 523264
    %v204 = vsel %vm203, %v201, %v188
    %v205 = vsel %vm203, %v202, %v190
    %vm206 = vcmask 785408
    %v207 = vsel %vm206, %v204, %v196
    %v208 = vsel %vm206, %v205, %v198
    %v210 = vlaneseq
    %v211 = vshrl.u32 %v210, 7
    %v212 = vsub.s32 0, %v211
    %v213 = vrot.slane %v64, %v212
    %v214 = vlaneseq
    %v215 = vshrl.u32 %v214, 7
    %v216 = vsub.s32 1, %v215
    %v217 = vrot.slane %v64, %v216
    %220 = vmatprep.subr.mxu0 %v33
    %221 = vmatpush1.msra.mxu0 %v32
    %222 = vmatprep.subr.mxu0 %v35
    %223 = vmatpush1.msra.mxu0 %v34
    %224 = vmatprep.subr.mxu0 %v37
    %225 = vmatpush1.msra.mxu0 %v36
    %226 = vmatprep.subr.mxu0 %v39
    %227 = vmatpush1.msra.mxu0 %v38
    %228 = vmatprep.subr.mxu0 %v41
    %229 = vmatpush1.msra.mxu0 %v40
    %230 = vmatprep.subr.mxu0 %v43
    %231 = vmatpush1.msra.mxu0 %v42
    %232 = vmatprep.subr.mxu0 %v45
    %233 = vmatpush1.msra.mxu0 %v44
    %234 = vmatprep.subr.mxu0 %v47
    %235 = vmatpush1.msra.mxu0 %v46
    %236 = vmatprep.subr.mxu0 %v49
    %237 = vmatpush1.msra.mxu0 %v48
    %238 = vmatprep.subr.mxu0 %v51
    %239 = vmatpush1.msra.mxu0 %v50
    %240 = vmatprep.subr.mxu0 %v53
    %241 = vmatpush1.msra.mxu0 %v52
    %242 = vmatprep.subr.mxu0 %v55
    %243 = vmatpush1.msra.mxu0 %v54
    %244 = vmatprep.subr.mxu0 %v57
    %245 = vmatpush1.msra.mxu0 %v56
    %246 = vmatprep.subr.mxu0 %v59
    %247 = vmatpush1.msra.mxu0 %v58
    %248 = vmatprep.subr.mxu0 %v61
    %249 = vmatpush1.msra.mxu0 %v60
    %250 = vmatprep.subr.mxu0 %v63
    %251 = vmatpush1.msra.mxu0 %v62
    %252 = vmatprep.subr.mxu0 0.0
    %253 = vmatpush1.msra.mxu0 0.0
    %254 = vmatprep.subr.mxu0 0.0
    %255 = vmatpush1.msra.mxu0 0.0
    %256 = vmatprep.subr.mxu0 0.0
    %257 = vmatpush1.msra.mxu0 0.0
    %258 = vmatprep.subr.mxu0 0.0
    %259 = vmatpush1.msra.mxu0 0.0
    %260 = vmatprep.subr.mxu0 0.0
    %261 = vmatpush1.msra.mxu0 0.0
    %262 = vmatprep.subr.mxu0 0.0
    %263 = vmatpush1.msra.mxu0 0.0
    %264 = vmatprep.subr.mxu0 0.0
    %265 = vmatpush1.msra.mxu0 0.0
    %266 = vmatprep.subr.mxu0 0.0
    %267 = vmatpush1.msra.mxu0 0.0
    %268 = vmatprep.subr.mxu0 0.0
    %269 = vmatpush1.msra.mxu0 0.0
    %270 = vmatprep.subr.mxu0 0.0
    %271 = vmatpush1.msra.mxu0 0.0
    %272 = vmatprep.subr.mxu0 0.0
    %273 = vmatpush1.msra.mxu0 0.0
    %274 = vmatprep.subr.mxu0 0.0
    %275 = vmatpush1.msra.mxu0 0.0
    %276 = vmatprep.subr.mxu0 0.0
    %277 = vmatpush1.msra.mxu0 0.0
    %278 = vmatprep.subr.mxu0 0.0
    %279 = vmatpush1.msra.mxu0 0.0
    %280 = vmatprep.subr.mxu0 0.0
    %281 = vmatpush1.msra.mxu0 0.0
    %282 = vmatprep.subr.mxu0 0.0
    %283 = vmatpush1.msra.mxu0 0.0
    %284 = vmatprep.mubr.f32.mxu0 0.0
    %285 = vmatmul.mubr.f32.gmra.mrb[0].mxu0 %v207
    %v286 = vpop.f32.mrb[0].mxu0
    %v287 = vadd.f32 %v213, %v286
    %v288 = vpop.f32.mrb[0].mxu0
    %v289 = vadd.f32 %v217, %v288
    %290 = vmatprep.mubr.f32.mxu0 0.0
    %291 = vmatmul.mubr.f32.gmra.mrb[0].mxu0 %v208
    %v292 = vpop.f32.mrb[0].mxu0
    %v293 = vadd.f32 %v213, %v292
    %v294 = vpop.f32.mrb[0].mxu0
    %v295 = vadd.f32 %v217, %v294
    %296 = vdwg.mxu0
    %v297 = vxor.u32 %v287, 2147483648
    %v298 = vxor.u32 %v289, 2147483648
    %v299 = vxor.u32 %v293, 2147483648
    %v300 = vxor.u32 %v295, 2147483648
    %v301 = vmul.f32 %v297, 1.442695
    %v302 = vpow.pop %v301
    %v303 = vmul.f32 %v298, 1.442695
    %v304 = vpow.pop %v303
    %v305 = vmul.f32 %v299, 1.442695
    %v306 = vpow.pop %v305
    %v307 = vmul.f32 %v300, 1.442695
    %v308 = vpow.pop %v307
    %v309 = vadd.f32 %v302, 1.0
    %v310 = vadd.f32 %v304, 1.0
    %v311 = vadd.f32 %v306, 1.0
    %v312 = vadd.f32 %v308, 1.0
    %v313 = vrcp.pop %v309
    %v314 = vmul.f32 1.0, %v313
    %v315 = vrcp.pop %v310
    %v316 = vmul.f32 1.0, %v315
    %v317 = vrcp.pop %v311
    %v318 = vmul.f32 1.0, %v317
    %v319 = vrcp.pop %v312
    %v320 = vmul.f32 1.0, %v319
    %vm321 = vcmask 1041409
    %v322 = vsel %vm321, %v122, %v121
    %324 = vrot.lane.b32.xlu0 %v322, 32
    %v325 = vpop.permute.xlu0 %324
    %v327 = vsel %vm105, %v322, %v325
    %v329 = vlaneseq
    %v330 = vshrl.u32 %v329, 7
    %v331 = vsub.s32 0, %v330
    %v332 = vrot.slane %v73, %v331
    %v335 = vsel %vm203, %v327, 0
    %337 = vmatprep.subr.mxu0 0.0
    %338 = vmatpush1.msra.mxu0 %v65
    %339 = vmatprep.subr.mxu0 0.0
    %340 = vmatpush1.msra.mxu0 %v66
    %341 = vmatprep.subr.mxu0 0.0
    %342 = vmatpush1.msra.mxu0 %v67
    %343 = vmatprep.subr.mxu0 0.0
    %344 = vmatpush1.msra.mxu0 %v68
    %345 = vmatprep.subr.mxu0 0.0
    %346 = vmatpush1.msra.mxu0 %v69
    %347 = vmatprep.subr.mxu0 0.0
    %348 = vmatpush1.msra.mxu0 %v70
    %349 = vmatprep.subr.mxu0 0.0
    %350 = vmatpush1.msra.mxu0 %v71
    %351 = vmatprep.subr.mxu0 0.0
    %352 = vmatpush1.msra.mxu0 %v72
    %353 = vmatprep.subr.mxu0 0.0
    %354 = vmatpush1.msra.mxu0 0.0
    %355 = vmatprep.subr.mxu0 0.0
    %356 = vmatpush1.msra.mxu0 0.0
    %357 = vmatprep.subr.mxu0 0.0
    %358 = vmatpush1.msra.mxu0 0.0
    %359 = vmatprep.subr.mxu0 0.0
    %360 = vmatpush1.msra.mxu0 0.0
    %361 = vmatprep.subr.mxu0 0.0
    %362 = vmatpush1.msra.mxu0 0.0
    %363 = vmatprep.subr.mxu0 0.0
    %364 = vmatpush1.msra.mxu0 0.0
    %365 = vmatprep.subr.mxu0 0.0
    %366 = vmatpush1.msra.mxu0 0.0
    %367 = vmatprep.subr.mxu0 0.0
    %368 = vmatpush1.msra.mxu0 0.0
    %369 = vmatprep.subr.mxu0 0.0
    %370 = vmatpush1.msra.mxu0 0.0
    %371 = vmatprep.subr.mxu0 0.0
    %372 = vmatpush1.msra.mxu0 0.0
    %373 = vmatprep.subr.mxu0 0.0
    %374 = vmatpush1.msra.mxu0 0.0
    %375 = vmatprep.subr.mxu0 0.0
    %376 = vmatpush1.msra.mxu0 0.0
    %377 = vmatprep.subr.mxu0 0.0
    %378 = vmatpush1.msra.mxu0 0.0
    %379 = vmatprep.subr.mxu0 0.0
    %380 = vmatpush1.msra.mxu0 0.0
    %381 = vmatprep.subr.mxu0 0.0
    %382 = vmatpush1.msra.mxu0 0.0
    %383 = vmatprep.subr.mxu0 0.0
    %384 = vmatpush1.msra.mxu0 0.0
    %385 = vmatprep.subr.mxu0 0.0
    %386 = vmatpush1.msra.mxu0 0.0
    %387 = vmatprep.subr.mxu0 0.0
    %388 = vmatpush1.msra.mxu0 0.0
    %389 = vmatprep.subr.mxu0 0.0
    %390 = vmatpush1.msra.mxu0 0.0
    %391 = vmatprep.subr.mxu0 0.0
    %392 = vmatpush1.msra.mxu0 0.0
    %393 = vmatprep.subr.mxu0 0.0
    %394 = vmatpush1.msra.mxu0 0.0
    %395 = vmatprep.subr.mxu0 0.0
    %396 = vmatpush1.msra.mxu0 0.0
    %397 = vmatprep.subr.mxu0 0.0
    %398 = vmatpush1.msra.mxu0 0.0
    %399 = vmatprep.subr.mxu0 0.0
    %400 = vmatpush1.msra.mxu0 0.0
    %401 = vmatprep.mubr.f32.mxu0 0.0
    %402 = vmatmul.mubr.f32.gmra.mrb[0].mxu0 %v335
    %v403 = vpop.f32.mrb[0].mxu0
    %v404 = vadd.f32 %v332, %v403
    %v405 = vpop.f32.mrb[0].mxu0
    %406 = vdwg.mxu0
    %v407 = vxor.u32 %v404, 2147483648
    %v408 = vmul.f32 %v407, 1.442695
    %v409 = vpow.pop %v408
    %v410 = vadd.f32 %v409, 1.0
    %v411 = vrcp.pop %v410
    %v412 = vmul.f32 1.0, %v411
    %413 = vrot.lane.b32.xlu0 %v30, 64
    %v414 = vpop.permute.xlu0 %413
    %415 = vrot.lane.b32.xlu0 %v31, 64
    %v416 = vpop.permute.xlu0 %415
    %v419 = vmul.f32 %v316, %v414
    %v420 = vmul.f32 %v320, %v416
    %vm421 = vcmask 785920
    %v422 = vsel %vm421, %v419, 0.0
    %v423 = vrot.slane %v422, 4
    %v424 = vadd.f32 %v422, %v423
    %v425 = vrot.slane %v424, 2
    %v426 = vadd.f32 %v424, %v425
    %v427 = vrot.slane %v426, 1
    %v428 = vadd.f32 %v426, %v427
    %v429 = vsel %vm421, %v420, 0.0
    %v430 = vrot.slane %v429, 4
    %v431 = vadd.f32 %v429, %v430
    %v432 = vrot.slane %v431, 2
    %v433 = vadd.f32 %v431, %v432
    %v434 = vrot.slane %v433, 1
    %v435 = vadd.f32 %v433, %v434
    %v438 = vsel %vm321, %v138, %v137
    %v440 = vmul.f32 %v412, %v438
    %v442 = vrot.slane %v440, 1
    %443 = vrot.lane.b32.xlu0 %v440, 64
    %v444 = vpop.permute.xlu0 %443
    %445 = vrot.lane.b32.xlu0 %v442, 64
    %v446 = vpop.permute.xlu0 %445
    %v449 = vadd.f32 %v428, %v444
    %v450 = vadd.f32 %v435, %v446
    %v451 = vtanh.pop %v449
    %v452 = vtanh.pop %v450
    %v455 = vrot.slane %v452, 7
    %v456 = vsel %vm321, %v455, %v451
    %457 = vrot.lane.b32.xlu0 %v456, 96
    %v458 = vpop.permute.xlu0 %457
    %v460 = vmul.f32 %v412, %v458
    %463 = vrot.lane.b32.xlu0 %v167, 32
    %v464 = vpop.permute.xlu0 %463
    %465 = vrot.lane.b32.xlu0 %v168, 32
    %v466 = vpop.permute.xlu0 %465
    %v469 = vmul.f32 %v314, %v464
    %v470 = vmul.f32 %v318, %v466
    %473 = vrot.lane.b32.xlu0 %v175, 64
    %v474 = vpop.permute.xlu0 %473
    %475 = vrot.lane.b32.xlu0 %v176, 64
    %v476 = vpop.permute.xlu0 %475
    %v479 = vmul.f32 %v314, %v474
    %v480 = vmul.f32 %v318, %v476
    %483 = vrot.lane.b32.xlu0 %v479, 96
    %v484 = vpop.permute.xlu0 %483
    %485 = vrot.lane.b32.xlu0 %v480, 96
    %v486 = vpop.permute.xlu0 %485
    %v489 = vadd.f32 %v469, %v484
    %v490 = vadd.f32 %v470, %v486
    %v491 = vadd.f32 %v314, %v316
    %v492 = vadd.f32 %v318, %v320
    %v493 = vmul.f32 %v491, %v30
    %v494 = vmul.f32 %v492, %v31
    %497 = vrot.lane.b32.xlu0 %v493, 32
    %v498 = vpop.permute.xlu0 %497
    %499 = vrot.lane.b32.xlu0 %v494, 32
    %v500 = vpop.permute.xlu0 %499
    %v503 = vadd.f32 %v489, %v498
    %v504 = vadd.f32 %v490, %v500
    %505 = vrot.lane.b32.xlu0 %v137, 96
    %v506 = vpop.permute.xlu0 %505
    %507 = vrot.lane.b32.xlu0 %v138, 96
    %v508 = vpop.permute.xlu0 %507
    %v511 = vmul.f32 %v314, %v506
    %v512 = vmul.f32 %v318, %v508
    %515 = vrot.lane.b32.xlu0 %v511, 64
    %v516 = vpop.permute.xlu0 %515
    %517 = vrot.lane.b32.xlu0 %v512, 64
    %v518 = vpop.permute.xlu0 %517
    %v521 = vadd.f32 %v503, %v516
    %v522 = vadd.f32 %v504, %v518
    %v523 = vtanh.pop %v521
    %v524 = vtanh.pop %v522
    %v525 = vmul.f32 %v316, %v523
    %v526 = vmul.f32 %v320, %v524
    %vm527 = vcmask 523520
    %v528 = vsel %vm527, %v525, 0.0
    %v529 = vrot.slane %v528, 4
    %v530 = vadd.f32 %v528, %v529
    %v531 = vrot.slane %v530, 2
    %v532 = vadd.f32 %v530, %v531
    %v533 = vrot.slane %v532, 1
    %v534 = vadd.f32 %v532, %v533
    %v535 = vsel %vm527, %v526, 0.0
    %v536 = vrot.slane %v535, 4
    %v537 = vadd.f32 %v535, %v536
    %v538 = vrot.slane %v537, 2
    %v539 = vadd.f32 %v537, %v538
    %v540 = vrot.slane %v539, 1
    %v541 = vadd.f32 %v539, %v540
    %v542 = vmul.f32 %v534, %v120
    %v543 = vmul.f32 %v541, %v120
    %v546 = vrot.slane %v525, 7
    %v547 = vrot.slane %v526, 7
    %v548 = vsel %vm141, %v546, %v547
    %549 = vrot.lane.b32.xlu0 %v546, 96
    %v550 = vpop.permute.xlu0 %549
    %551 = vrot.lane.b32.xlu0 %v548, 96
    %v552 = vpop.permute.xlu0 %551
    %v555 = vsel %vm141, 0.0, %v550
    %v556 = vsel %vm101, 0.0, %v555
    %v557 = vsel %vm102, 0.0, %v552
    %v558 = vrot.slane %v525, 1
    %v559 = vrot.slane %v526, 1
    %v560 = vsel %vm150, %v558, %v559
    %v563 = vsel %vm150, %v559, 0.0
    %v564 = vsel %vm103, 0.0, %v560
    %v565 = vsel %vm104, 0.0, %v563
    %v568 = vrot.slane %v521, 7
    %v569 = vrot.slane %v522, 7
    %v570 = vsel %vm141, %v568, %v569
    %571 = vrot.lane.b32.xlu0 %v568, 96
    %v572 = vpop.permute.xlu0 %571
    %573 = vrot.lane.b32.xlu0 %v570, 96
    %v574 = vpop.permute.xlu0 %573
    %v577 = vsel %vm141, 0.0, %v572
    %v578 = vsel %vm101, 0.0, %v577
    %v579 = vsel %vm102, 0.0, %v574
    %v580 = vrot.slane %v521, 1
    %v581 = vrot.slane %v522, 1
    %v582 = vsel %vm150, %v580, %v581
    %v585 = vsel %vm150, %v581, 0.0
    %v586 = vsel %vm103, 0.0, %v582
    %v587 = vsel %vm104, 0.0, %v585
    %v590 = vunpack.c.l.s4 1966171168
    %v591 = vunpack.c.0.s8 %v590
    %v592 = vlaneseq
    %v593 = vshrl.u32 %v592, 7
    %v594 = vsub.s32 %v591, %v593
    %v595 = vrot.slane %v460, %v594
    %v596 = vcombine.high %v595, %v595
    %v598 = vunpack.c.l.s4 1966171168
    %v599 = vunpack.c.0.s8 %v598
    %v600 = vlaneseq
    %v601 = vshrl.u32 %v600, 7
    %v602 = vsub.s32 %v599, %v601
    %v603 = vrot.slane %v595, %v602
    %v605 = vunpack.c.l.s4 1966171168
    %v606 = vunpack.c.0.s8 %v605
    %v607 = vlaneseq
    %v608 = vshrl.u32 %v607, 7
    %v609 = vsub.s32 %v606, %v608
    %v610 = vrot.slane %v596, %v609
    %v611 = vlaneseq
    %v612 = vshrl.u32 %v611, 7
    %v613 = vsub.s32 0, %v612
    %v614 = vrot.slane %v603, %v613
    %v615 = vlaneseq
    %v616 = vshrl.u32 %v615, 7
    %v617 = vsub.s32 0, %v616
    %v618 = vrot.slane %v610, %v617
    %v619 = vlaneseq
    %v620 = vshrl.u32 %v619, 7
    %v621 = vsub.s32 0, %v620
    %v622 = vrot.slane %v449, %v621
    %v623 = vlaneseq
    %v624 = vshrl.u32 %v623, 7
    %v625 = vsub.s32 0, %v624
    %v626 = vrot.slane %v450, %v625
    %627 = vrot.lane.b32.xlu0 %v525, 96
    %v628 = vpop.permute.xlu0 %627
    %629 = vrot.lane.b32.xlu0 %v526, 96
    %v630 = vpop.permute.xlu0 %629
    %635 = vrot.lane.b32.xlu0 %v556, 32
    %v636 = vpop.permute.xlu0 %635
    %637 = vrot.lane.b32.xlu0 %v557, 32
    %v638 = vpop.permute.xlu0 %637
    %643 = vrot.lane.b32.xlu0 %v564, 32
    %v644 = vpop.permute.xlu0 %643
    %645 = vrot.lane.b32.xlu0 %v565, 32
    %v646 = vpop.permute.xlu0 %645
    %649 = vrot.lane.b32.xlu0 %v614, 64
    %v650 = vpop.permute.xlu0 %649
    %651 = vrot.lane.b32.xlu0 %v618, 64
    %v652 = vpop.permute.xlu0 %651
    %v655 = vsel %vm105, %v628, %v636
    %v656 = vsel %vm105, %v630, %v638
    %v657 = vsel %vm203, %v655, %v644
    %v658 = vsel %vm203, %v656, %v646
    %v659 = vsel %vm206, %v657, %v650
    %v660 = vsel %vm206, %v658, %v652
    %661 = vmatprep.subr.mxu0 %v33
    %662 = vmatpush1.msra.mxu0 %v32
    %663 = vmatprep.subr.mxu0 %v35
    %664 = vmatpush1.msra.mxu0 %v34
    %665 = vmatprep.subr.mxu0 %v37
    %666 = vmatpush1.msra.mxu0 %v36
    %667 = vmatprep.subr.mxu0 %v39
    %668 = vmatpush1.msra.mxu0 %v38
    %669 = vmatprep.subr.mxu0 %v41
    %670 = vmatpush1.msra.mxu0 %v40
    %671 = vmatprep.subr.mxu0 %v43
    %672 = vmatpush1.msra.mxu0 %v42
    %673 = vmatprep.subr.mxu0 %v45
    %674 = vmatpush1.msra.mxu0 %v44
    %675 = vmatprep.subr.mxu0 %v47
    %676 = vmatpush1.msra.mxu0 %v46
    %677 = vmatprep.subr.mxu0 %v49
    %678 = vmatpush1.msra.mxu0 %v48
    %679 = vmatprep.subr.mxu0 %v51
    %680 = vmatpush1.msra.mxu0 %v50
    %681 = vmatprep.subr.mxu0 %v53
    %682 = vmatpush1.msra.mxu0 %v52
    %683 = vmatprep.subr.mxu0 %v55
    %684 = vmatpush1.msra.mxu0 %v54
    %685 = vmatprep.subr.mxu0 %v57
    %686 = vmatpush1.msra.mxu0 %v56
    %687 = vmatprep.subr.mxu0 %v59
    %688 = vmatpush1.msra.mxu0 %v58
    %689 = vmatprep.subr.mxu0 %v61
    %690 = vmatpush1.msra.mxu0 %v60
    %691 = vmatprep.subr.mxu0 %v63
    %692 = vmatpush1.msra.mxu0 %v62
    %693 = vmatprep.subr.mxu0 0.0
    %694 = vmatpush1.msra.mxu0 0.0
    %695 = vmatprep.subr.mxu0 0.0
    %696 = vmatpush1.msra.mxu0 0.0
    %697 = vmatprep.subr.mxu0 0.0
    %698 = vmatpush1.msra.mxu0 0.0
    %699 = vmatprep.subr.mxu0 0.0
    %700 = vmatpush1.msra.mxu0 0.0
    %701 = vmatprep.subr.mxu0 0.0
    %702 = vmatpush1.msra.mxu0 0.0
    %703 = vmatprep.subr.mxu0 0.0
    %704 = vmatpush1.msra.mxu0 0.0
    %705 = vmatprep.subr.mxu0 0.0
    %706 = vmatpush1.msra.mxu0 0.0
    %707 = vmatprep.subr.mxu0 0.0
    %708 = vmatpush1.msra.mxu0 0.0
    %709 = vmatprep.subr.mxu0 0.0
    %710 = vmatpush1.msra.mxu0 0.0
    %711 = vmatprep.subr.mxu0 0.0
    %712 = vmatpush1.msra.mxu0 0.0
    %713 = vmatprep.subr.mxu0 0.0
    %714 = vmatpush1.msra.mxu0 0.0
    %715 = vmatprep.subr.mxu0 0.0
    %716 = vmatpush1.msra.mxu0 0.0
    %717 = vmatprep.subr.mxu0 0.0
    %718 = vmatpush1.msra.mxu0 0.0
    %719 = vmatprep.subr.mxu0 0.0
    %720 = vmatpush1.msra.mxu0 0.0
    %721 = vmatprep.subr.mxu0 0.0
    %722 = vmatpush1.msra.mxu0 0.0
    %723 = vmatprep.subr.mxu0 0.0
    %724 = vmatpush1.msra.mxu0 0.0
    %725 = vmatprep.mubr.f32.mxu0 0.0
    %726 = vmatmul.mubr.f32.gmra.mrb[0].mxu0 %v659
    %v727 = vpop.f32.mrb[0].mxu0
    %v728 = vadd.f32 %v213, %v727
    %v729 = vpop.f32.mrb[0].mxu0
    %v730 = vadd.f32 %v217, %v729
    %731 = vmatprep.mubr.f32.mxu0 0.0
    %732 = vmatmul.mubr.f32.gmra.mrb[0].mxu0 %v660
    %v733 = vpop.f32.mrb[0].mxu0
    %v734 = vadd.f32 %v213, %v733
    %v735 = vpop.f32.mrb[0].mxu0
    %v736 = vadd.f32 %v217, %v735
    %737 = vdwg.mxu0
    %v738 = vxor.u32 %v728, 2147483648
    %v739 = vxor.u32 %v730, 2147483648
    %v740 = vxor.u32 %v734, 2147483648
    %v741 = vxor.u32 %v736, 2147483648
    %v742 = vmul.f32 %v738, 1.442695
    %v743 = vpow.pop %v742
    %v744 = vmul.f32 %v739, 1.442695
    %v745 = vpow.pop %v744
    %v746 = vmul.f32 %v740, 1.442695
    %v747 = vpow.pop %v746
    %v748 = vmul.f32 %v741, 1.442695
    %v749 = vpow.pop %v748
    %v750 = vadd.f32 %v743, 1.0
    %v751 = vadd.f32 %v745, 1.0
    %v752 = vadd.f32 %v747, 1.0
    %v753 = vadd.f32 %v749, 1.0
    %v754 = vrcp.pop %v750
    %v755 = vmul.f32 1.0, %v754
    %v756 = vrcp.pop %v751
    %v757 = vmul.f32 1.0, %v756
    %v758 = vrcp.pop %v752
    %v759 = vmul.f32 1.0, %v758
    %v760 = vrcp.pop %v753
    %v761 = vmul.f32 1.0, %v760
    %762 = vrot.lane.b32.xlu0 %v460, 96
    %v763 = vpop.permute.xlu0 %762
    %v767 = vsel %vm321, %v543, %v542
    %v769 = vsel %vm105, %v763, %v767
    %v771 = vsel %vm203, %v769, 0
    %773 = vmatprep.subr.mxu0 0.0
    %774 = vmatpush1.msra.mxu0 %v65
    %775 = vmatprep.subr.mxu0 0.0
    %776 = vmatpush1.msra.mxu0 %v66
    %777 = vmatprep.subr.mxu0 0.0
    %778 = vmatpush1.msra.mxu0 %v67
    %779 = vmatprep.subr.mxu0 0.0
    %780 = vmatpush1.msra.mxu0 %v68
    %781 = vmatprep.subr.mxu0 0.0
    %782 = vmatpush1.msra.mxu0 %v69
    %783 = vmatprep.subr.mxu0 0.0
    %784 = vmatpush1.msra.mxu0 %v70
    %785 = vmatprep.subr.mxu0 0.0
    %786 = vmatpush1.msra.mxu0 %v71
    %787 = vmatprep.subr.mxu0 0.0
    %788 = vmatpush1.msra.mxu0 %v72
    %789 = vmatprep.subr.mxu0 0.0
    %790 = vmatpush1.msra.mxu0 0.0
    %791 = vmatprep.subr.mxu0 0.0
    %792 = vmatpush1.msra.mxu0 0.0
    %793 = vmatprep.subr.mxu0 0.0
    %794 = vmatpush1.msra.mxu0 0.0
    %795 = vmatprep.subr.mxu0 0.0
    %796 = vmatpush1.msra.mxu0 0.0
    %797 = vmatprep.subr.mxu0 0.0
    %798 = vmatpush1.msra.mxu0 0.0
    %799 = vmatprep.subr.mxu0 0.0
    %800 = vmatpush1.msra.mxu0 0.0
    %801 = vmatprep.subr.mxu0 0.0
    %802 = vmatpush1.msra.mxu0 0.0
    %803 = vmatprep.subr.mxu0 0.0
    %804 = vmatpush1.msra.mxu0 0.0
    %805 = vmatprep.subr.mxu0 0.0
    %806 = vmatpush1.msra.mxu0 0.0
    %807 = vmatprep.subr.mxu0 0.0
    %808 = vmatpush1.msra.mxu0 0.0
    %809 = vmatprep.subr.mxu0 0.0
    %810 = vmatpush1.msra.mxu0 0.0
    %811 = vmatprep.subr.mxu0 0.0
    %812 = vmatpush1.msra.mxu0 0.0
    %813 = vmatprep.subr.mxu0 0.0
    %814 = vmatpush1.msra.mxu0 0.0
    %815 = vmatprep.subr.mxu0 0.0
    %816 = vmatpush1.msra.mxu0 0.0
    %817 = vmatprep.subr.mxu0 0.0
    %818 = vmatpush1.msra.mxu0 0.0
    %819 = vmatprep.subr.mxu0 0.0
    %820 = vmatpush1.msra.mxu0 0.0
    %821 = vmatprep.subr.mxu0 0.0
    %822 = vmatpush1.msra.mxu0 0.0
    %823 = vmatprep.subr.mxu0 0.0
    %824 = vmatpush1.msra.mxu0 0.0
    %825 = vmatprep.subr.mxu0 0.0
    %826 = vmatpush1.msra.mxu0 0.0
    %827 = vmatprep.subr.mxu0 0.0
    %828 = vmatpush1.msra.mxu0 0.0
    %829 = vmatprep.subr.mxu0 0.0
    %830 = vmatpush1.msra.mxu0 0.0
    %831 = vmatprep.subr.mxu0 0.0
    %832 = vmatpush1.msra.mxu0 0.0
    %833 = vmatprep.subr.mxu0 0.0
    %834 = vmatpush1.msra.mxu0 0.0
    %835 = vmatprep.subr.mxu0 0.0
    %836 = vmatpush1.msra.mxu0 0.0
    %837 = vmatprep.mubr.f32.mxu0 0.0
    %838 = vmatmul.mubr.f32.gmra.mrb[0].mxu0 %v771
    %v839 = vpop.f32.mrb[0].mxu0
    %v840 = vadd.f32 %v332, %v839
    %v841 = vpop.f32.mrb[0].mxu0
    %842 = vdwg.mxu0
    %v843 = vxor.u32 %v840, 2147483648
    %v844 = vmul.f32 %v843, 1.442695
    %v845 = vpow.pop %v844
    %v846 = vadd.f32 %v845, 1.0
    %v847 = vrcp.pop %v846
    %v848 = vmul.f32 1.0, %v847
    %849 = vrot.lane.b32.xlu0 %v521, 32
    %v850 = vpop.permute.xlu0 %849
    %851 = vrot.lane.b32.xlu0 %v522, 32
    %v852 = vpop.permute.xlu0 %851
    %v855 = vmul.f32 %v757, %v850
    %v856 = vmul.f32 %v761, %v852
    %v857 = vsel %vm421, %v855, 0.0
    %v858 = vrot.slane %v857, 4
    %v859 = vadd.f32 %v857, %v858
    %v860 = vrot.slane %v859, 2
    %v861 = vadd.f32 %v859, %v860
    %v862 = vrot.slane %v861, 1
    %v863 = vadd.f32 %v861, %v862
    %v864 = vsel %vm421, %v856, 0.0
    %v865 = vrot.slane %v864, 4
    %v866 = vadd.f32 %v864, %v865
    %v867 = vrot.slane %v866, 2
    %v868 = vadd.f32 %v866, %v867
    %v869 = vrot.slane %v868, 1
    %v870 = vadd.f32 %v868, %v869
    %v873 = vrot.slane %v450, 7
    %v874 = vsel %vm321, %v873, %v449
    %875 = vrot.lane.b32.xlu0 %v874, 64
    %v876 = vpop.permute.xlu0 %875
    %v878 = vmul.f32 %v848, %v876
    %v880 = vrot.slane %v878, 1
    %881 = vrot.lane.b32.xlu0 %v878, 64
    %v882 = vpop.permute.xlu0 %881
    %883 = vrot.lane.b32.xlu0 %v880, 64
    %v884 = vpop.permute.xlu0 %883
    %v887 = vadd.f32 %v863, %v882
    %v888 = vadd.f32 %v870, %v884
    %v889 = vtanh.pop %v887
    %v890 = vtanh.pop %v888
    %v893 = vrot.slane %v890, 7
    %v894 = vsel %vm321, %v893, %v889
    %895 = vrot.lane.b32.xlu0 %v894, 96
    %v896 = vpop.permute.xlu0 %895
    %v898 = vmul.f32 %v848, %v896
    %901 = vrot.lane.b32.xlu0 %v578, 32
    %v902 = vpop.permute.xlu0 %901
    %903 = vrot.lane.b32.xlu0 %v579, 32
    %v904 = vpop.permute.xlu0 %903
    %v907 = vmul.f32 %v755, %v902
    %v908 = vmul.f32 %v759, %v904
    %911 = vrot.lane.b32.xlu0 %v586, 32
    %v912 = vpop.permute.xlu0 %911
    %913 = vrot.lane.b32.xlu0 %v587, 32
    %v914 = vpop.permute.xlu0 %913
    %v917 = vmul.f32 %v755, %v912
    %v918 = vmul.f32 %v759, %v914
    %921 = vrot.lane.b32.xlu0 %v917, 96
    %v922 = vpop.permute.xlu0 %921
    %923 = vrot.lane.b32.xlu0 %v918, 96
    %v924 = vpop.permute.xlu0 %923
    %v927 = vadd.f32 %v907, %v922
    %v928 = vadd.f32 %v908, %v924
    %v929 = vadd.f32 %v755, %v757
    %v930 = vadd.f32 %v759, %v761
    %931 = vrot.lane.b32.xlu0 %v521, 96
    %v932 = vpop.permute.xlu0 %931
    %933 = vrot.lane.b32.xlu0 %v522, 96
    %v934 = vpop.permute.xlu0 %933
    %v937 = vmul.f32 %v929, %v932
    %v938 = vmul.f32 %v930, %v934
    %941 = vrot.lane.b32.xlu0 %v937, 32
    %v942 = vpop.permute.xlu0 %941
    %943 = vrot.lane.b32.xlu0 %v938, 32
    %v944 = vpop.permute.xlu0 %943
    %v947 = vadd.f32 %v927, %v942
    %v948 = vadd.f32 %v928, %v944
    %951 = vrot.lane.b32.xlu0 %v622, 32
    %v952 = vpop.permute.xlu0 %951
    %953 = vrot.lane.b32.xlu0 %v626, 32
    %v954 = vpop.permute.xlu0 %953
    %v957 = vmul.f32 %v755, %v952
    %v958 = vmul.f32 %v759, %v954
    %961 = vrot.lane.b32.xlu0 %v957, 64
    %v962 = vpop.permute.xlu0 %961
    %963 = vrot.lane.b32.xlu0 %v958, 64
    %v964 = vpop.permute.xlu0 %963
    %v967 = vadd.f32 %v947, %v962
    %v968 = vadd.f32 %v948, %v964
    %v969 = vtanh.pop %v967
    %v970 = vtanh.pop %v968
    %v971 = vmul.f32 %v757, %v969
    %v972 = vmul.f32 %v761, %v970
    %975 = vrot.lane.b32.xlu0 %v971, 96
    %v976 = vpop.permute.xlu0 %975
    %977 = vrot.lane.b32.xlu0 %v972, 96
    %v978 = vpop.permute.xlu0 %977
    %981 = vst.msk [vmem:[#allocation2] sm:$0xff] %vm105, %v976
    %982 = vst.msk [vmem:[#allocation2 + $0x8] sm:$0xff] %vm105, %v978
    %985 = vrot.lane.b32.xlu0 %v967, 96
    %v986 = vpop.permute.xlu0 %985
    %987 = vrot.lane.b32.xlu0 %v968, 96
    %v988 = vpop.permute.xlu0 %987
    %991 = vst.msk [vmem:[#allocation4] sm:$0xff] %vm105, %v986
    %992 = vst.msk [vmem:[#allocation4 + $0x8] sm:$0xff] %vm105, %v988
    %v995 = vunpack.c.l.s4 1966171168
    %v996 = vunpack.c.0.s8 %v995
    %v997 = vlaneseq
    %v998 = vshrl.u32 %v997, 7
    %v999 = vsub.s32 %v996, %v998
    %v1000 = vrot.slane %v898, %v999
    %v1001 = vcombine.high %v1000, %v1000
    %v1003 = vunpack.c.l.s4 1966171168
    %v1004 = vunpack.c.0.s8 %v1003
    %v1005 = vlaneseq
    %v1006 = vshrl.u32 %v1005, 7
    %v1007 = vsub.s32 %v1004, %v1006
    %v1008 = vrot.slane %v1000, %v1007
    %v1010 = vunpack.c.l.s4 1966171168
    %v1011 = vunpack.c.0.s8 %v1010
    %v1012 = vlaneseq
    %v1013 = vshrl.u32 %v1012, 7
    %v1014 = vsub.s32 %v1011, %v1013
    %v1015 = vrot.slane %v1001, %v1014
    %v1016 = vlaneseq
    %v1017 = vshrl.u32 %v1016, 7
    %v1018 = vsub.s32 0, %v1017
    %v1019 = vrot.slane %v1008, %v1018
    %v1020 = vlaneseq
    %v1021 = vshrl.u32 %v1020, 7
    %v1022 = vsub.s32 0, %v1021
    %v1023 = vrot.slane %v1015, %v1022
    %1024 = vrot.lane.b32.xlu0 %v1019, 96
    %v1025 = vpop.permute.xlu0 %1024
    %1026 = vrot.lane.b32.xlu0 %v1023, 96
    %v1027 = vpop.permute.xlu0 %1026
    %vm1030 = vcmask 253952
    %1031 = vst.msk [vmem:[#allocation6] sm:$0x1] %vm1030, %v1025
    %1032 = vst.msk [vmem:[#allocation6 + $0x1] sm:$0x1] %vm1030, %v1027
    // Predicated region
    $region26: #{tpu_custom_call.1} parent=1 // pred_check
      _
    $region27: #{tpu_custom_call.1} parent=1 // pred_check_branch
      %1034 = sbr.rel (0) target = $region29
    $region28: #{tpu_custom_call.1} parent=1 // pred_region
      %s1036 = ssub.s32 256, 256
      %1037 = vsyncadd [#allocation3], %s1036
      %s1038 = sshll.u32 [#allocation2], 4
      %s1039 = int_to_ptr.vmem [resolvable:$true] %s1038
      %1044 = dma.vmem_to_hbm [thread:$0]  %s1039, 256, %s6, [#allocation3], 128, 128, 8
    $region29: #{tpu_custom_call.1} parent=1 // pred_fallthru
      _
    // Predicated region
    $region30: #{tpu_custom_call.1} parent=1 // pred_check
      _
    $region31: #{tpu_custom_call.1} parent=1 // pred_check_branch
      %1046 = sbr.rel (0) target = $region33
    $region32: #{tpu_custom_call.1} parent=1 // pred_region
      %s1048 = ssub.s32 256, 256
      %1049 = vsyncadd [#allocation5], %s1048
      %s1050 = sshll.u32 [#allocation4], 4
      %s1051 = int_to_ptr.vmem [resolvable:$true] %s1050
      %1056 = dma.vmem_to_hbm [thread:$0]  %s1051, 256, %s7, [#allocation5], 128, 128, 8
    $region33: #{tpu_custom_call.1} parent=1 // pred_fallthru
      _
    // Predicated region
    $region34: #{tpu_custom_call.1} parent=1 // pred_check
      _
    $region35: #{tpu_custom_call.1} parent=1 // pred_check_branch
      %1058 = sbr.rel (0) target = $region37
    $region36: #{tpu_custom_call.1} parent=1 // pred_region
      %s1060 = ssub.s32 32, 32
      %1061 = vsyncadd [#allocation5], %s1060
      %s1062 = sshll.u32 [#allocation6], 4
      %s1063 = int_to_ptr.vmem [resolvable:$true] %s1062
      %1068 = dma.vmem_to_hbm [thread:$0]  %s1063, 32, %s8, [#allocation5], 16, 16, 1
    $region37: #{tpu_custom_call.1} parent=1 // pred_fallthru
      _
    // Predicated region
    $region38: #{tpu_custom_call.1} parent=1 // pred_check
      _
    $region39: #{tpu_custom_call.1} parent=1 // pred_check_branch
      %1070 = sbr.rel (0) target = $region41
    $region40: #{tpu_custom_call.1} parent=1 // pred_region
      %1071 = dma.done [#allocation3], 256
    $region41: #{tpu_custom_call.1} parent=1 // pred_fallthru
      _
    // Predicated region
    $region42: #{tpu_custom_call.1} parent=1 // pred_check
      _
    $region43: #{tpu_custom_call.1} parent=1 // pred_check_branch
      %1073 = sbr.rel (0) target = $region45
    $region44: #{tpu_custom_call.1} parent=1 // pred_region
      %1074 = dma.done [#allocation5], 256
    $region45: #{tpu_custom_call.1} parent=1 // pred_fallthru
      _
    // Predicated region
    $region46: #{tpu_custom_call.1} parent=1 // pred_check
      _
    $region47: #{tpu_custom_call.1} parent=1 // pred_check_branch
      %1076 = sbr.rel (0) target = $region49
    $region48: #{tpu_custom_call.1} parent=1 // pred_region
      %1077 = dma.done [#allocation5], 32
    $region49: #{tpu_custom_call.1} parent=1 // pred_fallthru
      _
    %1078 = vsyncpa [#allocation3], 1
    %1079 = vsyncpa [#allocation5], 1

</llo_original>
